<compile_context>
chip_gen: v6e
topology: v6e:2x2x1
jax: 0.10.0
libtpu: 0.0.40
codegen_flags: <defaults>
</compile_context>

<pallas_src>
import functools

import jax
import jax.numpy as jnp
import numpy as np
from jax.experimental import pallas as pl
from jax.experimental.pallas import tpu as pltpu


def _cam_feature_kernel(w_ref, f_ref, x_ref, cf_ref, cams_ref, *, hw):
    """One grid step == one image; everything below is VMEM-resident.

    w_ref    : (N, C)    classifier weight (1x1 conv, no bias)
    f_ref    : (C, HW)   stage4 features for this image (batch dim squeezed)
    x_ref    : (N, 1)    logits column for this image
    cf_ref   : (N, C)    cams_feature for this image
    cams_ref : (N, HW)   max-normalized CAMs for this image
    """
    w = w_ref[...]                                                 # (N, C)
    fb = f_ref[...]                                                # (C, HW)

    # 1x1 conv over channels == one MXU matmul per image.
    scores = jnp.dot(w, fb, preferred_element_type=jnp.float32)   # (N, HW)

    # classifier(gap2d(feature)) == spatial mean of the pre-ReLU scores
    # (the 1x1 conv is linear, so it commutes with the average).
    x_ref[...] = jnp.mean(scores, axis=-1, keepdims=True)         # (N, 1)

    # relu + adaptive_max_pool2d(., (1,1)) -> per-map spatial max normalization.
    relu_scores = jnp.maximum(scores, 0.0)
    m = jnp.max(relu_scores, axis=-1, keepdims=True)              # (N, 1)
    cams = relu_scores / (m + 1e-5)                               # (N, HW)
    cams_ref[...] = cams

    # cams_feature = mean_{hw}(cams * feature) = (cams @ feature^T) / HW,
    # expressed as a dot_general contracting HW on both operands so no
    # (C, HW) transpose is ever materialized.
    cf = jax.lax.dot_general(cams, fb, (((1,), (1,)), ((), ())),
                             preferred_element_type=jnp.float32)  # (N, C)
    cf_ref[...] = cf * (1.0 / hw)


@jax.jit
def net_cam_feature_forward(features, classifier_weight):
    """features:          (B, C, H, W) float32  (stage4 output, NCHW)
    classifier_weight:    (N, C, 1, 1) float32  (torch Conv2d weight layout)
    returns (x, cams_feature, cams) matching Net_CAM_Feature.forward:
      x            : (B, N)
      cams_feature : (B, N, C)
      cams         : (B, N, H, W)
    """
    B, C, H, W = features.shape
    N = classifier_weight.shape[0]
    HW = H * W

    # ---- XLA glue: free, contiguous reshapes only (no HBM transpose) ----
    wmat = classifier_weight.reshape(N, C)
    feat = features.reshape(B, C, HW)

    kernel = functools.partial(_cam_feature_kernel, hw=HW)

    flops = 4 * B * N * C * HW          # scores matmul + cams_feature matmul
    bytes_accessed = 4 * (N * C + B * C * HW                     # inputs
                          + B * N + B * N * C + B * N * HW)      # outputs

    x_bn1, cams_feature, cams_flat = pl.pallas_call(
        kernel,
        out_shape=(
            jax.ShapeDtypeStruct((B, N, 1), jnp.float32),
            jax.ShapeDtypeStruct((B, N, C), jnp.float32),
            jax.ShapeDtypeStruct((B, N, HW), jnp.float32),
        ),
        grid=(B,),
        in_specs=[
            pl.BlockSpec((N, C), lambda b: (0, 0)),
            pl.BlockSpec((None, C, HW), lambda b: (b, 0, 0)),
        ],
        out_specs=(
            pl.BlockSpec((None, N, 1), lambda b: (b, 0, 0)),
            pl.BlockSpec((None, N, C), lambda b: (b, 0, 0)),
            pl.BlockSpec((None, N, HW), lambda b: (b, 0, 0)),
        ),
        compiler_params=pltpu.CompilerParams(
            dimension_semantics=("parallel",)),
        cost_estimate=pl.CostEstimate(
            flops=flops, transcendentals=0, bytes_accessed=bytes_accessed),
    )(wmat, feat)

    x = x_bn1.reshape(B, N)
    cams = cams_flat.reshape(B, N, H, W)
    return x, cams_feature, cams


def _reference(features, classifier_weight):
    """Plain-JAX reference of Net_CAM_Feature.forward (torch op order)."""
    B, C, H, W = features.shape
    N = classifier_weight.shape[0]
    wmat = classifier_weight.reshape(N, C)

    gap = jnp.mean(features, axis=(2, 3))                        # (B, C)
    x = gap @ wmat.T                                             # (B, N)

    scores = jnp.einsum("nc,bchw->bnhw", wmat, features)         # 1x1 conv
    cams = jnp.maximum(scores, 0.0)
    cams = cams / (jnp.max(cams, axis=(2, 3), keepdims=True) + 1e-5)

    cams_feature = jnp.einsum("bnhw,bchw->bnc", cams, features) / (H * W)
    return x, cams_feature, cams


if __name__ == "__main__":
    # Faithful-but-small shapes: classifier is Conv2d(2048, 20, 1, bias=False);
    # stage4 of the stride-16 ResNet-50 gives (B, 2048, H/16, W/16), so a
    # 256x256 image pair -> features of shape (2, 2048, 16, 16) (HW = 256 keeps
    # every kernel operand/output lane-dense).
    B, C, H, W = 2, 2048, 16, 16
    N_CLASSES = 20

    key = jax.random.PRNGKey(0)
    kf, kw = jax.random.split(key)
    # Synthetic stage4 feature map (post-ReLU, so non-negative like ResNet output).
    features = jax.nn.relu(jax.random.normal(kf, (B, C, H, W), dtype=jnp.float32))
    # Deterministic classifier weight, torch Conv2d layout (out, in, kh, kw).
    classifier_weight = (
        jax.random.normal(kw, (N_CLASSES, C, 1, 1), dtype=jnp.float32) * 0.02
    )

    x, cams_feature, cams = net_cam_feature_forward(features, classifier_weight)
    jax.block_until_ready((x, cams_feature, cams))

    xr, cfr, cr = _reference(features, classifier_weight)
    assert x.shape == (B, N_CLASSES), x.shape
    assert cams_feature.shape == (B, N_CLASSES, C), cams_feature.shape
    assert cams.shape == (B, N_CLASSES, H, W), cams.shape
    np.testing.assert_allclose(np.asarray(x), np.asarray(xr), rtol=2e-4, atol=2e-4)
    np.testing.assert_allclose(np.asarray(cams), np.asarray(cr), rtol=2e-4, atol=2e-4)
    np.testing.assert_allclose(
        np.asarray(cams_feature), np.asarray(cfr), rtol=2e-4, atol=2e-4)

    print("KERNEL_OK")
</pallas_src>

<mosaic_0001>
module attributes {stable_mosaic.version = 11 : i64} {
  func.func @_cam_feature_kernel(%arg0: i32, %arg1: memref<20x2048xf32, #tpu.memory_space<vmem>>, %arg2: memref<1x2048x256xf32, #tpu.memory_space<vmem>>, %arg3: memref<1x20x1xf32, #tpu.memory_space<vmem>>, %arg4: memref<1x20x2048xf32, #tpu.memory_space<vmem>>, %arg5: memref<1x20x256xf32, #tpu.memory_space<vmem>>) attributes {dimension_semantics = [#tpu.dimension_semantics<parallel>], iteration_bounds = array<i64: 2>, scalar_prefetch = 0 : i64, scratch_operands = 0 : i64, tpu.core_type = #tpu.core_type<tc>, window_params = [{pipeline_mode = #tpu.pipeline_mode<synchronous>, transform_indices = @transform_0, window_bounds = array<i64: 20, 2048>}, {transform_indices = @transform_1, window_bounds = array<i64: 1, 2048, 256>}, {transform_indices = @transform_2, window_bounds = array<i64: 1, 20, 1>}, {transform_indices = @transform_3, window_bounds = array<i64: 1, 20, 2048>}, {transform_indices = @transform_4, window_bounds = array<i64: 1, 20, 256>}]} {
    %c0 = arith.constant 0 : index
    %c0_0 = arith.constant 0 : index
    %0 = vector.load %arg1[%c0, %c0_0] : memref<20x2048xf32, #tpu.memory_space<vmem>>, vector<20x2048xf32>
    %c0_1 = arith.constant 0 : index
    %c0_2 = arith.constant 0 : index
    %c0_3 = arith.constant 0 : index
    %1 = vector.load %arg2[%c0_1, %c0_2, %c0_3] : memref<1x2048x256xf32, #tpu.memory_space<vmem>>, vector<1x2048x256xf32>
    %2 = vector.shape_cast %1 : vector<1x2048x256xf32> to vector<2048x256xf32>
    %cst = arith.constant dense<0.000000e+00> : vector<20x256xf32>
    %3 = tpu.matmul %0, %2, %cst {dimension_numbers = #tpu.dot_dimension_numbers<[1], [0], [0], [1], [0, 0, 1, 1], [], []>} : vector<20x2048xf32>, vector<2048x256xf32>, vector<20x256xf32> -> vector<20x256xf32>
    %cst_4 = arith.constant dense<0.000000e+00> : vector<20xf32>
    %4 = vector.multi_reduction <add>, %3, %cst_4 [1] : vector<20x256xf32> to vector<20xf32>
    %5 = vector.shape_cast %4 : vector<20xf32> to vector<20x1xf32>
    %cst_5 = arith.constant 2.560000e+02 : f32
    %6 = vector.broadcast %cst_5 : f32 to vector<20x1xf32>
    %7 = arith.divf %5, %6 : vector<20x1xf32>
    %c0_6 = arith.constant 0 : index
    %c0_7 = arith.constant 0 : index
    %c0_8 = arith.constant 0 : index
    %8 = vector.load %arg3[%c0_6, %c0_7, %c0_8] : memref<1x20x1xf32, #tpu.memory_space<vmem>>, vector<1x20x1xf32>
    %9 = vector.shape_cast %8 : vector<1x20x1xf32> to vector<20x1xf32>
    %10 = vector.shape_cast %7 : vector<20x1xf32> to vector<1x20x1xf32>
    tpu.vector_store %arg3[%c0_6, %c0_7, %c0_8], %10 {strides = array<i32>} : memref<1x20x1xf32, #tpu.memory_space<vmem>>, vector<1x20x1xf32>,
    %cst_9 = arith.constant 0.000000e+00 : f32
    %11 = vector.broadcast %cst_9 : f32 to vector<20x256xf32>
    %12 = arith.maximumf %3, %11 : vector<20x256xf32>
    %cst_10 = arith.constant dense<0xFF800000> : vector<20xf32>
    %13 = vector.multi_reduction <maximumf>, %12, %cst_10 [1] : vector<20x256xf32> to vector<20xf32>
    %14 = vector.shape_cast %13 : vector<20xf32> to vector<20x1xf32>
    %cst_11 = arith.constant 9.99999974E-6 : f32
    %15 = vector.broadcast %cst_11 : f32 to vector<20x1xf32>
    %16 = arith.addf %14, %15 : vector<20x1xf32>
    %17 = vector.broadcast %16 : vector<20x1xf32> to vector<20x256xf32>
    %18 = arith.divf %12, %17 : vector<20x256xf32>
    %c0_12 = arith.constant 0 : index
    %c0_13 = arith.constant 0 : index
    %c0_14 = arith.constant 0 : index
    %19 = vector.load %arg5[%c0_12, %c0_13, %c0_14] : memref<1x20x256xf32, #tpu.memory_space<vmem>>, vector<1x20x256xf32>
    %20 = vector.shape_cast %19 : vector<1x20x256xf32> to vector<20x256xf32>
    %21 = vector.shape_cast %18 : vector<20x256xf32> to vector<1x20x256xf32>
    tpu.vector_store %arg5[%c0_12, %c0_13, %c0_14], %21 {strides = array<i32>} : memref<1x20x256xf32, #tpu.memory_space<vmem>>, vector<1x20x256xf32>,
    %cst_15 = arith.constant dense<0.000000e+00> : vector<20x2048xf32>
    %22 = tpu.matmul %18, %2, %cst_15 {dimension_numbers = #tpu.dot_dimension_numbers<[1], [1], [0], [0], [0, 0, 1, 0], [], []>} : vector<20x256xf32>, vector<2048x256xf32>, vector<20x2048xf32> -> vector<20x2048xf32>
    %cst_16 = arith.constant 3.906250e-03 : f32
    %23 = vector.broadcast %cst_16 : f32 to vector<20x2048xf32>
    %24 = arith.mulf %22, %23 : vector<20x2048xf32>
    %c0_17 = arith.constant 0 : index
    %c0_18 = arith.constant 0 : index
    %c0_19 = arith.constant 0 : index
    %25 = vector.load %arg4[%c0_17, %c0_18, %c0_19] : memref<1x20x2048xf32, #tpu.memory_space<vmem>>, vector<1x20x2048xf32>
    %26 = vector.shape_cast %25 : vector<1x20x2048xf32> to vector<20x2048xf32>
    %27 = vector.shape_cast %24 : vector<20x2048xf32> to vector<1x20x2048xf32>
    tpu.vector_store %arg4[%c0_17, %c0_18, %c0_19], %27 {strides = array<i32>} : memref<1x20x2048xf32, #tpu.memory_space<vmem>>, vector<1x20x2048xf32>,
    return
  }
  func.func @transform_0(%arg0: i32) -> (i32, i32) {
    %c0_i32 = arith.constant 0 : i32
    %c0_i32_0 = arith.constant 0 : i32
    %c0_i32_1 = arith.constant 0 : i32
    return %c0_i32, %c0_i32_0 : i32, i32
  }
  func.func @transform_1(%arg0: i32) -> (i32, i32, i32) {
    %c0_i32 = arith.constant 0 : i32
    %c0_i32_0 = arith.constant 0 : i32
    %c0_i32_1 = arith.constant 0 : i32
    return %arg0, %c0_i32, %c0_i32_0 : i32, i32, i32
  }
  func.func @transform_2(%arg0: i32) -> (i32, i32, i32) {
    %c0_i32 = arith.constant 0 : i32
    %c0_i32_0 = arith.constant 0 : i32
    %c0_i32_1 = arith.constant 0 : i32
    return %arg0, %c0_i32, %c0_i32_0 : i32, i32, i32
  }
  func.func @transform_3(%arg0: i32) -> (i32, i32, i32) {
    %c0_i32 = arith.constant 0 : i32
    %c0_i32_0 = arith.constant 0 : i32
    %c0_i32_1 = arith.constant 0 : i32
    return %arg0, %c0_i32, %c0_i32_0 : i32, i32, i32
  }
  func.func @transform_4(%arg0: i32) -> (i32, i32, i32) {
    %c0_i32 = arith.constant 0 : i32
    %c0_i32_0 = arith.constant 0 : i32
    %c0_i32_1 = arith.constant 0 : i32
    return %arg0, %c0_i32, %c0_i32_0 : i32, i32, i32
  }
}

</mosaic_0001>

<llo_original>
// kernel: net_cam_feature_forward.1
$region0: #{net_cam_feature_forward.1}
  #allocation0 [shape = 'u32[]', space=smem, size = 0x4, offset = 0x4, fixed_abs, tag = 'smem constant byte address 0x4 - core index']
  #allocation1 [shape = 'u32[144,128]{1,0:T(1,128)}', space=vmem, size = 0x12000, scoped, tag = 'internal scratch']
  %s0 = inlined_call_operand.vmem [shape: f32[20,2048], index: 0, kind: input, shape index: {}]
  %s1 = inlined_call_operand.vmem [shape: f32[2,2048,256], index: 1, kind: input, shape index: {}]
  %s2 = inlined_call_operand.vmem [shape: f32[2,20,1], index: 2, kind: output, shape index: {0}]
  %s3 = inlined_call_operand.vmem [shape: f32[2,20,2048], index: 3, kind: output, shape index: {1}]
  %s4 = inlined_call_operand.vmem [shape: f32[2,20,256], index: 4, kind: output, shape index: {2}]
  %5 = xla_tuple %s2, %s3, %s4
  %s6 = sld [smem:[#allocation0]]
  $region57: #{net_cam_feature_forward.1} parent=0
    _
  %s8 = ssub.s32 1, %s6
  %s9 = scalar_select 0, %s8, %s6
  loop: start=0, step=1, limit=4
  $region2: #{net_cam_feature_forward.1} parent=0 // loop_pre_header
    _
  $region3: #{net_cam_feature_forward.1} parent=0 // loop_header
    %s11 = sphi 0, %s15
    %p12 = scmp.ge.s32.totalorder %s11, 4
    %s19 = sphi 0, %s19
    %s21 = sphi 0, %s19
    %s22 = sphi 0, %s21
    %s36 = sphi 0, %s22
    %s42 = sphi 0, %s44
    %s45 = sphi 0, %s42
    %s46 = sphi 0, %s45
    %s62 = sphi 0, %s46
    %s68 = sphi 0, %s70
    %s71 = sphi 0, %s68
    %s72 = sphi 0, %s71
    %s88 = sphi 0, %s72
    %s94 = sphi 0, %s96
    %s97 = sphi 0, %s94
    %s98 = sphi 0, %s97
    %s114 = sphi 0, %s98
    %s120 = sphi 0, %s122
    %s123 = sphi 0, %s120
    %s124 = sphi 0, %s123
    %s140 = sphi 0, %s124
  $region4: #{net_cam_feature_forward.1} parent=0 // loop_header_branch
    %14 = sbr.rel (%p12) target = $region8
  $region5: #{net_cam_feature_forward.1} parent=0 // loop_body
    %s16 = ssub.s32 %s11, 1
    %s17 = ssub.s32 %s11, 2
    %s18 = sadd.s32 %s11, 1
    %s20 = sadd.s32 %s19, 1
    %p23 = scmp.eq.s32.totalorder %s11, 1
    %p24 = scmp.ne.s32.totalorder %s19, %s21
    %p25 = scmp.eq.s32.totalorder %s11, 0
    %p26 = por %p24, %p25
    %p27 = scmp.ne.s32.totalorder %s19, %s21
    %p28 = scmp.eq.s32.totalorder %s16, 1
    %p29 = por %p27, %p28
    %p30 = scmp.ne.s32.totalorder %s21, %s22
    %p31 = scmp.eq.s32.totalorder %s16, 0
    %p32 = por %p30, %p31
    %p33 = scmp.ne.s32.totalorder %s21, %s22
    %p34 = scmp.eq.s32.totalorder %s17, 1
    %p35 = por %p33, %p34
    %p37 = scmp.ne.s32.totalorder %s22, %s36
    %p38 = scmp.eq.s32.totalorder %s17, 0
    %p39 = por %p37, %p38
    %s40 = ssub.s32 %s11, %s18
    %p41 = scmp.eq.s32.totalorder %s40, 0
    %s43 = sadd.s32 %s42, 1
    %s44 = scalar_select %p41, %s42, %s43
    %p47 = pneg %p41
    %p48 = scmp.eq.s32.totalorder %s11, 1
    %p49 = por %p47, %p48
    %p50 = scmp.ne.s32.totalorder %s42, %s45
    %p51 = scmp.eq.s32.totalorder %s11, 0
    %p52 = por %p50, %p51
    %p53 = scmp.ne.s32.totalorder %s42, %s45
    %p54 = scmp.eq.s32.totalorder %s16, 1
    %p55 = por %p53, %p54
    %p56 = scmp.ne.s32.totalorder %s45, %s46
    %p57 = scmp.eq.s32.totalorder %s16, 0
    %p58 = por %p56, %p57
    %p59 = scmp.ne.s32.totalorder %s45, %s46
    %p60 = scmp.eq.s32.totalorder %s17, 1
    %p61 = por %p59, %p60
    %p63 = scmp.ne.s32.totalorder %s46, %s62
    %p64 = scmp.eq.s32.totalorder %s17, 0
    %p65 = por %p63, %p64
    %s66 = ssub.s32 %s11, %s18
    %p67 = scmp.eq.s32.totalorder %s66, 0
    %s69 = sadd.s32 %s68, 1
    %s70 = scalar_select %p67, %s68, %s69
    %p73 = pneg %p67
    %p74 = scmp.eq.s32.totalorder %s11, 1
    %p75 = por %p73, %p74
    %p76 = scmp.ne.s32.totalorder %s68, %s71
    %p77 = scmp.eq.s32.totalorder %s11, 0
    %p78 = por %p76, %p77
    %p79 = scmp.ne.s32.totalorder %s68, %s71
    %p80 = scmp.eq.s32.totalorder %s16, 1
    %p81 = por %p79, %p80
    %p82 = scmp.ne.s32.totalorder %s71, %s72
    %p83 = scmp.eq.s32.totalorder %s16, 0
    %p84 = por %p82, %p83
    %p85 = scmp.ne.s32.totalorder %s71, %s72
    %p86 = scmp.eq.s32.totalorder %s17, 1
    %p87 = por %p85, %p86
    %p89 = scmp.ne.s32.totalorder %s72, %s88
    %p90 = scmp.eq.s32.totalorder %s17, 0
    %p91 = por %p89, %p90
    %s92 = ssub.s32 %s11, %s18
    %p93 = scmp.eq.s32.totalorder %s92, 0
    %s95 = sadd.s32 %s94, 1
    %s96 = scalar_select %p93, %s94, %s95
    %p99 = pneg %p93
    %p100 = scmp.eq.s32.totalorder %s11, 1
    %p101 = por %p99, %p100
    %p102 = scmp.ne.s32.totalorder %s94, %s97
    %p103 = scmp.eq.s32.totalorder %s11, 0
    %p104 = por %p102, %p103
    %p105 = scmp.ne.s32.totalorder %s94, %s97
    %p106 = scmp.eq.s32.totalorder %s16, 1
    %p107 = por %p105, %p106
    %p108 = scmp.ne.s32.totalorder %s97, %s98
    %p109 = scmp.eq.s32.totalorder %s16, 0
    %p110 = por %p108, %p109
    %p111 = scmp.ne.s32.totalorder %s97, %s98
    %p112 = scmp.eq.s32.totalorder %s17, 1
    %p113 = por %p111, %p112
    %p115 = scmp.ne.s32.totalorder %s98, %s114
    %p116 = scmp.eq.s32.totalorder %s17, 0
    %p117 = por %p115, %p116
    %s118 = ssub.s32 %s11, %s18
    %p119 = scmp.eq.s32.totalorder %s118, 0
    %s121 = sadd.s32 %s120, 1
    %s122 = scalar_select %p119, %s120, %s121
    %p125 = pneg %p119
    %p126 = scmp.eq.s32.totalorder %s11, 1
    %p127 = por %p125, %p126
    %p128 = scmp.ne.s32.totalorder %s120, %s123
    %p129 = scmp.eq.s32.totalorder %s11, 0
    %p130 = por %p128, %p129
    %p131 = scmp.ne.s32.totalorder %s120, %s123
    %p132 = scmp.eq.s32.totalorder %s16, 1
    %p133 = por %p131, %p132
    %p134 = scmp.ne.s32.totalorder %s123, %s124
    %p135 = scmp.eq.s32.totalorder %s16, 0
    %p136 = por %p134, %p135
    %p137 = scmp.ne.s32.totalorder %s123, %s124
    %p138 = scmp.eq.s32.totalorder %s17, 1
    %p139 = por %p137, %p138
    %p141 = scmp.ne.s32.totalorder %s124, %s140
    %p142 = scmp.eq.s32.totalorder %s17, 0
    %p143 = por %p141, %p142
    %p144 = scmp.le.s32.totalorder 1, %s11
    %p145 = scmp.lt.s32.totalorder %s11, 3
    %p146 = pnand %p144, %p145
    %p147 = pneg %p146
    // Predicated region
    $region9: #{net_cam_feature_forward.1} parent=5 // pred_check
      _
    $region10: #{net_cam_feature_forward.1} parent=5 // pred_check_branch
      %149 = sbr.rel (%p146) target = $region12
    $region11: #{net_cam_feature_forward.1} parent=5 // pred_region
      %s150 = ssub.s32 %s11, 1
      // Predicated region
      $region13: #{net_cam_feature_forward.1} parent=11 // pred_check
        %p151 = pneg %p32
      $region14: #{net_cam_feature_forward.1} parent=11 // pred_check_branch
        %153 = sbr.rel (%p151) target = $region16
      $region15: #{net_cam_feature_forward.1} parent=11 // pred_region
        _
      $region16: #{net_cam_feature_forward.1} parent=11 // pred_fallthru
        _
    $region12: #{net_cam_feature_forward.1} parent=5 // pred_fallthru
      _
    %p154 = scmp.lt.s32.totalorder %s11, 2
    // Predicated region
    $region17: #{net_cam_feature_forward.1} parent=5 // pred_check
      %p155 = pneg %p154
    $region18: #{net_cam_feature_forward.1} parent=5 // pred_check_branch
      %157 = sbr.rel (%p155) target = $region20
    $region19: #{net_cam_feature_forward.1} parent=5 // pred_region
      // Predicated region
      $region21: #{net_cam_feature_forward.1} parent=19 // pred_check
        %p158 = pneg %p52
      $region22: #{net_cam_feature_forward.1} parent=19 // pred_check_branch
        %160 = sbr.rel (%p158) target = $region24
      $region23: #{net_cam_feature_forward.1} parent=19 // pred_region
        %p161 = scmp.lt.s32.totalorder %s11, 1
        %s162 = scalar_select %p161, %s11, 1
        %s163 = smul.addr %s162, 512
        %s164 = smul.addr %s163, 8
        %s165 = scalar_lea.vmem %s1, %s164
      $region24: #{net_cam_feature_forward.1} parent=19 // pred_fallthru
        _
    $region20: #{net_cam_feature_forward.1} parent=5 // pred_fallthru
      _
    %p166 = scmp.le.s32.totalorder 1, %s11
    %p167 = scmp.lt.s32.totalorder %s11, 3
    %p168 = pnand %p166, %p167
    %p169 = pneg %p168
    // Predicated region
    $region25: #{net_cam_feature_forward.1} parent=5 // pred_check
      _
    $region26: #{net_cam_feature_forward.1} parent=5 // pred_check_branch
      %171 = sbr.rel (%p168) target = $region28
    $region27: #{net_cam_feature_forward.1} parent=5 // pred_region
      %s172 = ssub.s32 %s11, 1
      %p173 = pneg %p32
      %p174 = pneg %p29
      %p175 = scmp.lt.s32.totalorder %s16, 1
      %s176 = scalar_select %p175, %s16, 1
      %s177 = smul.addr %s176, 512
      %s178 = smul.addr %s177, 8
      %s179 = scalar_lea.vmem %s1, %s178
      %p180 = pneg %p58
      %p181 = pneg %p55
      %p182 = pneg %p84
      %p183 = pneg %p81
      %p184 = scmp.lt.s32.totalorder %s16, 1
      %s185 = scalar_select %p184, %s16, 1
      %s186 = smul.addr %s185, 3
      %s187 = smul.addr %s186, 8
      %s188 = scalar_lea.vmem %s2, %s187
      %p189 = pneg %p110
      %p190 = pneg %p107
      %p191 = scmp.lt.s32.totalorder %s16, 1
      %s192 = scalar_select %p191, %s16, 1
      %s193 = smul.addr %s192, 48
      %s194 = smul.addr %s193, 8
      %s195 = scalar_lea.vmem %s3, %s194
      %p196 = pneg %p136
      %p197 = pneg %p133
      %p198 = scmp.lt.s32.totalorder %s16, 1
      %s199 = scalar_select %p198, %s16, 1
      %s200 = smul.addr %s199, 6
      %s201 = smul.addr %s200, 8
      %s202 = scalar_lea.vmem %s4, %s201
      %p203 = scmp.lt.s32.totalorder %s16, 1
      %s204 = scalar_select %p203, %s16, 1
      %s205 = smul.addr %s204, 512
      %s206 = smul.addr %s205, 8
      %s207 = scalar_lea.vmem %s1, %s206
      %p208 = scmp.lt.s32.totalorder %s16, 1
      %s209 = scalar_select %p208, %s16, 1
      %s210 = smul.addr %s209, 3
      %s211 = smul.addr %s210, 8
      %s212 = scalar_lea.vmem %s2, %s211
      %p213 = scmp.lt.s32.totalorder %s16, 1
      %s214 = scalar_select %p213, %s16, 1
      %s215 = smul.addr %s214, 48
      %s216 = smul.addr %s215, 8
      %s217 = scalar_lea.vmem %s3, %s216
      %p218 = scmp.lt.s32.totalorder %s16, 1
      %s219 = scalar_select %p218, %s16, 1
      %s220 = smul.addr %s219, 6
      %s221 = smul.addr %s220, 8
      %s222 = scalar_lea.vmem %s4, %s221
      %v223 = vld [vmem:[%s0] sm:$0xff]
      %v224 = vld [vmem:[%s0 + $0x8] sm:$0xff]
      %v225 = vld [vmem:[%s0 + $0x10] sm:$0xff]
      %v226 = vld [vmem:[%s0 + $0x18] sm:$0xff]
      %v227 = vld [vmem:[%s0 + $0x20] sm:$0xff]
      %v228 = vld [vmem:[%s0 + $0x28] sm:$0xff]
      %v229 = vld [vmem:[%s0 + $0x30] sm:$0xff]
      %v230 = vld [vmem:[%s0 + $0x38] sm:$0xff]
      %v231 = vld [vmem:[%s0 + $0x40] sm:$0xff]
      %v232 = vld [vmem:[%s0 + $0x48] sm:$0xff]
      %v233 = vld [vmem:[%s0 + $0x50] sm:$0xff]
      %v234 = vld [vmem:[%s0 + $0x58] sm:$0xff]
      %v235 = vld [vmem:[%s0 + $0x60] sm:$0xff]
      %v236 = vld [vmem:[%s0 + $0x68] sm:$0xff]
      %v237 = vld [vmem:[%s0 + $0x70] sm:$0xff]
      %v238 = vld [vmem:[%s0 + $0x78] sm:$0xff]
      %v239 = vld [vmem:[%s0 + $0x80] sm:$0xff]
      %v240 = vld [vmem:[%s0 + $0x88] sm:$0xff]
      %v241 = vld [vmem:[%s0 + $0x90] sm:$0xff]
      %v242 = vld [vmem:[%s0 + $0x98] sm:$0xff]
      %v243 = vld [vmem:[%s0 + $0xa0] sm:$0xff]
      %v244 = vld [vmem:[%s0 + $0xa8] sm:$0xff]
      %v245 = vld [vmem:[%s0 + $0xb0] sm:$0xff]
      %v246 = vld [vmem:[%s0 + $0xb8] sm:$0xff]
      %v247 = vld [vmem:[%s0 + $0xc0] sm:$0xff]
      %v248 = vld [vmem:[%s0 + $0xc8] sm:$0xff]
      %v249 = vld [vmem:[%s0 + $0xd0] sm:$0xff]
      %v250 = vld [vmem:[%s0 + $0xd8] sm:$0xff]
      %v251 = vld [vmem:[%s0 + $0xe0] sm:$0xff]
      %v252 = vld [vmem:[%s0 + $0xe8] sm:$0xff]
      %v253 = vld [vmem:[%s0 + $0xf0] sm:$0xff]
      %v254 = vld [vmem:[%s0 + $0xf8] sm:$0xff]
      %v255 = vld [vmem:[%s0 + $0x100] sm:$0xf]
      %v256 = vld [vmem:[%s0 + $0x108] sm:$0xf]
      %v257 = vld [vmem:[%s0 + $0x110] sm:$0xf]
      %v258 = vld [vmem:[%s0 + $0x118] sm:$0xf]
      %v259 = vld [vmem:[%s0 + $0x120] sm:$0xf]
      %v260 = vld [vmem:[%s0 + $0x128] sm:$0xf]
      %v261 = vld [vmem:[%s0 + $0x130] sm:$0xf]
      %v262 = vld [vmem:[%s0 + $0x138] sm:$0xf]
      %v263 = vld [vmem:[%s0 + $0x140] sm:$0xf]
      %v264 = vld [vmem:[%s0 + $0x148] sm:$0xf]
      %v265 = vld [vmem:[%s0 + $0x150] sm:$0xf]
      %v266 = vld [vmem:[%s0 + $0x158] sm:$0xf]
      %v267 = vld [vmem:[%s0 + $0x160] sm:$0xf]
      %v268 = vld [vmem:[%s0 + $0x168] sm:$0xf]
      %v269 = vld [vmem:[%s0 + $0x170] sm:$0xf]
      %v270 = vld [vmem:[%s0 + $0x178] sm:$0xf]
      %v271 = vld [vmem:[%s207] sm:$0xff]
      %v272 = vld [vmem:[%s207 + $0x8] sm:$0xff]
      %v273 = vld [vmem:[%s207 + $0x10] sm:$0xff]
      %v274 = vld [vmem:[%s207 + $0x18] sm:$0xff]
      %v275 = vld [vmem:[%s207 + $0x20] sm:$0xff]
      %v276 = vld [vmem:[%s207 + $0x28] sm:$0xff]
      %v277 = vld [vmem:[%s207 + $0x30] sm:$0xff]
      %v278 = vld [vmem:[%s207 + $0x38] sm:$0xff]
      %v279 = vld [vmem:[%s207 + $0x40] sm:$0xff]
      %v280 = vld [vmem:[%s207 + $0x48] sm:$0xff]
      %v281 = vld [vmem:[%s207 + $0x50] sm:$0xff]
      %v282 = vld [vmem:[%s207 + $0x58] sm:$0xff]
      %v283 = vld [vmem:[%s207 + $0x60] sm:$0xff]
      %v284 = vld [vmem:[%s207 + $0x68] sm:$0xff]
      %v285 = vld [vmem:[%s207 + $0x70] sm:$0xff]
      %v286 = vld [vmem:[%s207 + $0x78] sm:$0xff]
      %v287 = vld [vmem:[%s207 + $0x80] sm:$0xff]
      %v288 = vld [vmem:[%s207 + $0x88] sm:$0xff]
      %v289 = vld [vmem:[%s207 + $0x90] sm:$0xff]
      %v290 = vld [vmem:[%s207 + $0x98] sm:$0xff]
      %v291 = vld [vmem:[%s207 + $0xa0] sm:$0xff]
      %v292 = vld [vmem:[%s207 + $0xa8] sm:$0xff]
      %v293 = vld [vmem:[%s207 + $0xb0] sm:$0xff]
      %v294 = vld [vmem:[%s207 + $0xb8] sm:$0xff]
      %v295 = vld [vmem:[%s207 + $0xc0] sm:$0xff]
      %v296 = vld [vmem:[%s207 + $0xc8] sm:$0xff]
      %v297 = vld [vmem:[%s207 + $0xd0] sm:$0xff]
      %v298 = vld [vmem:[%s207 + $0xd8] sm:$0xff]
      %v299 = vld [vmem:[%s207 + $0xe0] sm:$0xff]
      %v300 = vld [vmem:[%s207 + $0xe8] sm:$0xff]
      %v301 = vld [vmem:[%s207 + $0xf0] sm:$0xff]
      %v302 = vld [vmem:[%s207 + $0xf8] sm:$0xff]
      %v303 = vld [vmem:[%s207 + $0x100] sm:$0xff]
      %v304 = vld [vmem:[%s207 + $0x108] sm:$0xff]
      %v305 = vld [vmem:[%s207 + $0x110] sm:$0xff]
      %v306 = vld [vmem:[%s207 + $0x118] sm:$0xff]
      %v307 = vld [vmem:[%s207 + $0x120] sm:$0xff]
      %v308 = vld [vmem:[%s207 + $0x128] sm:$0xff]
      %v309 = vld [vmem:[%s207 + $0x130] sm:$0xff]
      %v310 = vld [vmem:[%s207 + $0x138] sm:$0xff]
      %v311 = vld [vmem:[%s207 + $0x140] sm:$0xff]
      %v312 = vld [vmem:[%s207 + $0x148] sm:$0xff]
      %v313 = vld [vmem:[%s207 + $0x150] sm:$0xff]
      %v314 = vld [vmem:[%s207 + $0x158] sm:$0xff]
      %v315 = vld [vmem:[%s207 + $0x160] sm:$0xff]
      %v316 = vld [vmem:[%s207 + $0x168] sm:$0xff]
      %v317 = vld [vmem:[%s207 + $0x170] sm:$0xff]
      %v318 = vld [vmem:[%s207 + $0x178] sm:$0xff]
      %v319 = vld [vmem:[%s207 + $0x180] sm:$0xff]
      %v320 = vld [vmem:[%s207 + $0x188] sm:$0xff]
      %v321 = vld [vmem:[%s207 + $0x190] sm:$0xff]
      %v322 = vld [vmem:[%s207 + $0x198] sm:$0xff]
      %v323 = vld [vmem:[%s207 + $0x1a0] sm:$0xff]
      %v324 = vld [vmem:[%s207 + $0x1a8] sm:$0xff]
      %v325 = vld [vmem:[%s207 + $0x1b0] sm:$0xff]
      %v326 = vld [vmem:[%s207 + $0x1b8] sm:$0xff]
      %v327 = vld [vmem:[%s207 + $0x1c0] sm:$0xff]
      %v328 = vld [vmem:[%s207 + $0x1c8] sm:$0xff]
      %v329 = vld [vmem:[%s207 + $0x1d0] sm:$0xff]
      %v330 = vld [vmem:[%s207 + $0x1d8] sm:$0xff]
      %v331 = vld [vmem:[%s207 + $0x1e0] sm:$0xff]
      %v332 = vld [vmem:[%s207 + $0x1e8] sm:$0xff]
      %v333 = vld [vmem:[%s207 + $0x1f0] sm:$0xff]
      %v334 = vld [vmem:[%s207 + $0x1f8] sm:$0xff]
      %v335 = vld [vmem:[%s207 + $0x200] sm:$0xff]
      %v336 = vld [vmem:[%s207 + $0x208] sm:$0xff]
      %v337 = vld [vmem:[%s207 + $0x210] sm:$0xff]
      %v338 = vld [vmem:[%s207 + $0x218] sm:$0xff]
      %v339 = vld [vmem:[%s207 + $0x220] sm:$0xff]
      %v340 = vld [vmem:[%s207 + $0x228] sm:$0xff]
      %v341 = vld [vmem:[%s207 + $0x230] sm:$0xff]
      %v342 = vld [vmem:[%s207 + $0x238] sm:$0xff]
      %v343 = vld [vmem:[%s207 + $0x240] sm:$0xff]
      %v344 = vld [vmem:[%s207 + $0x248] sm:$0xff]
      %v345 = vld [vmem:[%s207 + $0x250] sm:$0xff]
      %v346 = vld [vmem:[%s207 + $0x258] sm:$0xff]
      %v347 = vld [vmem:[%s207 + $0x260] sm:$0xff]
      %v348 = vld [vmem:[%s207 + $0x268] sm:$0xff]
      %v349 = vld [vmem:[%s207 + $0x270] sm:$0xff]
      %v350 = vld [vmem:[%s207 + $0x278] sm:$0xff]
      %v351 = vld [vmem:[%s207 + $0x280] sm:$0xff]
      %v352 = vld [vmem:[%s207 + $0x288] sm:$0xff]
      %v353 = vld [vmem:[%s207 + $0x290] sm:$0xff]
      %v354 = vld [vmem:[%s207 + $0x298] sm:$0xff]
      %v355 = vld [vmem:[%s207 + $0x2a0] sm:$0xff]
      %v356 = vld [vmem:[%s207 + $0x2a8] sm:$0xff]
      %v357 = vld [vmem:[%s207 + $0x2b0] sm:$0xff]
      %v358 = vld [vmem:[%s207 + $0x2b8] sm:$0xff]
      %v359 = vld [vmem:[%s207 + $0x2c0] sm:$0xff]
      %v360 = vld [vmem:[%s207 + $0x2c8] sm:$0xff]
      %v361 = vld [vmem:[%s207 + $0x2d0] sm:$0xff]
      %v362 = vld [vmem:[%s207 + $0x2d8] sm:$0xff]
      %v363 = vld [vmem:[%s207 + $0x2e0] sm:$0xff]
      %v364 = vld [vmem:[%s207 + $0x2e8] sm:$0xff]
      %v365 = vld [vmem:[%s207 + $0x2f0] sm:$0xff]
      %v366 = vld [vmem:[%s207 + $0x2f8] sm:$0xff]
      %v367 = vld [vmem:[%s207 + $0x300] sm:$0xff]
      %v368 = vld [vmem:[%s207 + $0x308] sm:$0xff]
      %v369 = vld [vmem:[%s207 + $0x310] sm:$0xff]
      %v370 = vld [vmem:[%s207 + $0x318] sm:$0xff]
      %v371 = vld [vmem:[%s207 + $0x320] sm:$0xff]
      %v372 = vld [vmem:[%s207 + $0x328] sm:$0xff]
      %v373 = vld [vmem:[%s207 + $0x330] sm:$0xff]
      %v374 = vld [vmem:[%s207 + $0x338] sm:$0xff]
      %v375 = vld [vmem:[%s207 + $0x340] sm:$0xff]
      %v376 = vld [vmem:[%s207 + $0x348] sm:$0xff]
      %v377 = vld [vmem:[%s207 + $0x350] sm:$0xff]
      %v378 = vld [vmem:[%s207 + $0x358] sm:$0xff]
      %v379 = vld [vmem:[%s207 + $0x360] sm:$0xff]
      %v380 = vld [vmem:[%s207 + $0x368] sm:$0xff]
      %v381 = vld [vmem:[%s207 + $0x370] sm:$0xff]
      %v382 = vld [vmem:[%s207 + $0x378] sm:$0xff]
      %v383 = vld [vmem:[%s207 + $0x380] sm:$0xff]
      %v384 = vld [vmem:[%s207 + $0x388] sm:$0xff]
      %v385 = vld [vmem:[%s207 + $0x390] sm:$0xff]
      %v386 = vld [vmem:[%s207 + $0x398] sm:$0xff]
      %v387 = vld [vmem:[%s207 + $0x3a0] sm:$0xff]
      %v388 = vld [vmem:[%s207 + $0x3a8] sm:$0xff]
      %v389 = vld [vmem:[%s207 + $0x3b0] sm:$0xff]
      %v390 = vld [vmem:[%s207 + $0x3b8] sm:$0xff]
      %v391 = vld [vmem:[%s207 + $0x3c0] sm:$0xff]
      %v392 = vld [vmem:[%s207 + $0x3c8] sm:$0xff]
      %v393 = vld [vmem:[%s207 + $0x3d0] sm:$0xff]
      %v394 = vld [vmem:[%s207 + $0x3d8] sm:$0xff]
      %v395 = vld [vmem:[%s207 + $0x3e0] sm:$0xff]
      %v396 = vld [vmem:[%s207 + $0x3e8] sm:$0xff]
      %v397 = vld [vmem:[%s207 + $0x3f0] sm:$0xff]
      %v398 = vld [vmem:[%s207 + $0x3f8] sm:$0xff]
      %v399 = vld [vmem:[%s207 + $0x400] sm:$0xff]
      %v400 = vld [vmem:[%s207 + $0x408] sm:$0xff]
      %v401 = vld [vmem:[%s207 + $0x410] sm:$0xff]
      %v402 = vld [vmem:[%s207 + $0x418] sm:$0xff]
      %v403 = vld [vmem:[%s207 + $0x420] sm:$0xff]
      %v404 = vld [vmem:[%s207 + $0x428] sm:$0xff]
      %v405 = vld [vmem:[%s207 + $0x430] sm:$0xff]
      %v406 = vld [vmem:[%s207 + $0x438] sm:$0xff]
      %v407 = vld [vmem:[%s207 + $0x440] sm:$0xff]
      %v408 = vld [vmem:[%s207 + $0x448] sm:$0xff]
      %v409 = vld [vmem:[%s207 + $0x450] sm:$0xff]
      %v410 = vld [vmem:[%s207 + $0x458] sm:$0xff]
      %v411 = vld [vmem:[%s207 + $0x460] sm:$0xff]
      %v412 = vld [vmem:[%s207 + $0x468] sm:$0xff]
      %v413 = vld [vmem:[%s207 + $0x470] sm:$0xff]
      %v414 = vld [vmem:[%s207 + $0x478] sm:$0xff]
      %v415 = vld [vmem:[%s207 + $0x480] sm:$0xff]
      %v416 = vld [vmem:[%s207 + $0x488] sm:$0xff]
      %v417 = vld [vmem:[%s207 + $0x490] sm:$0xff]
      %v418 = vld [vmem:[%s207 + $0x498] sm:$0xff]
      %v419 = vld [vmem:[%s207 + $0x4a0] sm:$0xff]
      %v420 = vld [vmem:[%s207 + $0x4a8] sm:$0xff]
      %v421 = vld [vmem:[%s207 + $0x4b0] sm:$0xff]
      %v422 = vld [vmem:[%s207 + $0x4b8] sm:$0xff]
      %v423 = vld [vmem:[%s207 + $0x4c0] sm:$0xff]
      %v424 = vld [vmem:[%s207 + $0x4c8] sm:$0xff]
      %v425 = vld [vmem:[%s207 + $0x4d0] sm:$0xff]
      %v426 = vld [vmem:[%s207 + $0x4d8] sm:$0xff]
      %v427 = vld [vmem:[%s207 + $0x4e0] sm:$0xff]
      %v428 = vld [vmem:[%s207 + $0x4e8] sm:$0xff]
      %v429 = vld [vmem:[%s207 + $0x4f0] sm:$0xff]
      %v430 = vld [vmem:[%s207 + $0x4f8] sm:$0xff]
      %v431 = vld [vmem:[%s207 + $0x500] sm:$0xff]
      %v432 = vld [vmem:[%s207 + $0x508] sm:$0xff]
      %v433 = vld [vmem:[%s207 + $0x510] sm:$0xff]
      %v434 = vld [vmem:[%s207 + $0x518] sm:$0xff]
      %v435 = vld [vmem:[%s207 + $0x520] sm:$0xff]
      %v436 = vld [vmem:[%s207 + $0x528] sm:$0xff]
      %v437 = vld [vmem:[%s207 + $0x530] sm:$0xff]
      %v438 = vld [vmem:[%s207 + $0x538] sm:$0xff]
      %v439 = vld [vmem:[%s207 + $0x540] sm:$0xff]
      %v440 = vld [vmem:[%s207 + $0x548] sm:$0xff]
      %v441 = vld [vmem:[%s207 + $0x550] sm:$0xff]
      %v442 = vld [vmem:[%s207 + $0x558] sm:$0xff]
      %v443 = vld [vmem:[%s207 + $0x560] sm:$0xff]
      %v444 = vld [vmem:[%s207 + $0x568] sm:$0xff]
      %v445 = vld [vmem:[%s207 + $0x570] sm:$0xff]
      %v446 = vld [vmem:[%s207 + $0x578] sm:$0xff]
      %v447 = vld [vmem:[%s207 + $0x580] sm:$0xff]
      %v448 = vld [vmem:[%s207 + $0x588] sm:$0xff]
      %v449 = vld [vmem:[%s207 + $0x590] sm:$0xff]
      %v450 = vld [vmem:[%s207 + $0x598] sm:$0xff]
      %v451 = vld [vmem:[%s207 + $0x5a0] sm:$0xff]
      %v452 = vld [vmem:[%s207 + $0x5a8] sm:$0xff]
      %v453 = vld [vmem:[%s207 + $0x5b0] sm:$0xff]
      %v454 = vld [vmem:[%s207 + $0x5b8] sm:$0xff]
      %v455 = vld [vmem:[%s207 + $0x5c0] sm:$0xff]
      %v456 = vld [vmem:[%s207 + $0x5c8] sm:$0xff]
      %v457 = vld [vmem:[%s207 + $0x5d0] sm:$0xff]
      %v458 = vld [vmem:[%s207 + $0x5d8] sm:$0xff]
      %v459 = vld [vmem:[%s207 + $0x5e0] sm:$0xff]
      %v460 = vld [vmem:[%s207 + $0x5e8] sm:$0xff]
      %v461 = vld [vmem:[%s207 + $0x5f0] sm:$0xff]
      %v462 = vld [vmem:[%s207 + $0x5f8] sm:$0xff]
      %v463 = vld [vmem:[%s207 + $0x600] sm:$0xff]
      %v464 = vld [vmem:[%s207 + $0x608] sm:$0xff]
      %v465 = vld [vmem:[%s207 + $0x610] sm:$0xff]
      %v466 = vld [vmem:[%s207 + $0x618] sm:$0xff]
      %v467 = vld [vmem:[%s207 + $0x620] sm:$0xff]
      %v468 = vld [vmem:[%s207 + $0x628] sm:$0xff]
      %v469 = vld [vmem:[%s207 + $0x630] sm:$0xff]
      %v470 = vld [vmem:[%s207 + $0x638] sm:$0xff]
      %v471 = vld [vmem:[%s207 + $0x640] sm:$0xff]
      %v472 = vld [vmem:[%s207 + $0x648] sm:$0xff]
      %v473 = vld [vmem:[%s207 + $0x650] sm:$0xff]
      %v474 = vld [vmem:[%s207 + $0x658] sm:$0xff]
      %v475 = vld [vmem:[%s207 + $0x660] sm:$0xff]
      %v476 = vld [vmem:[%s207 + $0x668] sm:$0xff]
      %v477 = vld [vmem:[%s207 + $0x670] sm:$0xff]
      %v478 = vld [vmem:[%s207 + $0x678] sm:$0xff]
      %v479 = vld [vmem:[%s207 + $0x680] sm:$0xff]
      %v480 = vld [vmem:[%s207 + $0x688] sm:$0xff]
      %v481 = vld [vmem:[%s207 + $0x690] sm:$0xff]
      %v482 = vld [vmem:[%s207 + $0x698] sm:$0xff]
      %v483 = vld [vmem:[%s207 + $0x6a0] sm:$0xff]
      %v484 = vld [vmem:[%s207 + $0x6a8] sm:$0xff]
      %v485 = vld [vmem:[%s207 + $0x6b0] sm:$0xff]
      %v486 = vld [vmem:[%s207 + $0x6b8] sm:$0xff]
      %v487 = vld [vmem:[%s207 + $0x6c0] sm:$0xff]
      %v488 = vld [vmem:[%s207 + $0x6c8] sm:$0xff]
      %v489 = vld [vmem:[%s207 + $0x6d0] sm:$0xff]
      %v490 = vld [vmem:[%s207 + $0x6d8] sm:$0xff]
      %v491 = vld [vmem:[%s207 + $0x6e0] sm:$0xff]
      %v492 = vld [vmem:[%s207 + $0x6e8] sm:$0xff]
      %v493 = vld [vmem:[%s207 + $0x6f0] sm:$0xff]
      %v494 = vld [vmem:[%s207 + $0x6f8] sm:$0xff]
      %v495 = vld [vmem:[%s207 + $0x700] sm:$0xff]
      %v496 = vld [vmem:[%s207 + $0x708] sm:$0xff]
      %v497 = vld [vmem:[%s207 + $0x710] sm:$0xff]
      %v498 = vld [vmem:[%s207 + $0x718] sm:$0xff]
      %v499 = vld [vmem:[%s207 + $0x720] sm:$0xff]
      %v500 = vld [vmem:[%s207 + $0x728] sm:$0xff]
      %v501 = vld [vmem:[%s207 + $0x730] sm:$0xff]
      %v502 = vld [vmem:[%s207 + $0x738] sm:$0xff]
      %v503 = vld [vmem:[%s207 + $0x740] sm:$0xff]
      %v504 = vld [vmem:[%s207 + $0x748] sm:$0xff]
      %v505 = vld [vmem:[%s207 + $0x750] sm:$0xff]
      %v506 = vld [vmem:[%s207 + $0x758] sm:$0xff]
      %v507 = vld [vmem:[%s207 + $0x760] sm:$0xff]
      %v508 = vld [vmem:[%s207 + $0x768] sm:$0xff]
      %v509 = vld [vmem:[%s207 + $0x770] sm:$0xff]
      %v510 = vld [vmem:[%s207 + $0x778] sm:$0xff]
      %v511 = vld [vmem:[%s207 + $0x780] sm:$0xff]
      %v512 = vld [vmem:[%s207 + $0x788] sm:$0xff]
      %v513 = vld [vmem:[%s207 + $0x790] sm:$0xff]
      %v514 = vld [vmem:[%s207 + $0x798] sm:$0xff]
      %v515 = vld [vmem:[%s207 + $0x7a0] sm:$0xff]
      %v516 = vld [vmem:[%s207 + $0x7a8] sm:$0xff]
      %v517 = vld [vmem:[%s207 + $0x7b0] sm:$0xff]
      %v518 = vld [vmem:[%s207 + $0x7b8] sm:$0xff]
      %v519 = vld [vmem:[%s207 + $0x7c0] sm:$0xff]
      %v520 = vld [vmem:[%s207 + $0x7c8] sm:$0xff]
      %v521 = vld [vmem:[%s207 + $0x7d0] sm:$0xff]
      %v522 = vld [vmem:[%s207 + $0x7d8] sm:$0xff]
      %v523 = vld [vmem:[%s207 + $0x7e0] sm:$0xff]
      %v524 = vld [vmem:[%s207 + $0x7e8] sm:$0xff]
      %v525 = vld [vmem:[%s207 + $0x7f0] sm:$0xff]
      %v526 = vld [vmem:[%s207 + $0x7f8] sm:$0xff]
      %v527 = vld [vmem:[%s207 + $0x800] sm:$0xff]
      %v528 = vld [vmem:[%s207 + $0x808] sm:$0xff]
      %v529 = vld [vmem:[%s207 + $0x810] sm:$0xff]
      %v530 = vld [vmem:[%s207 + $0x818] sm:$0xff]
      %v531 = vld [vmem:[%s207 + $0x820] sm:$0xff]
      %v532 = vld [vmem:[%s207 + $0x828] sm:$0xff]
      %v533 = vld [vmem:[%s207 + $0x830] sm:$0xff]
      %v534 = vld [vmem:[%s207 + $0x838] sm:$0xff]
      %v535 = vld [vmem:[%s207 + $0x840] sm:$0xff]
      %v536 = vld [vmem:[%s207 + $0x848] sm:$0xff]
      %v537 = vld [vmem:[%s207 + $0x850] sm:$0xff]
      %v538 = vld [vmem:[%s207 + $0x858] sm:$0xff]
      %v539 = vld [vmem:[%s207 + $0x860] sm:$0xff]
      %v540 = vld [vmem:[%s207 + $0x868] sm:$0xff]
      %v541 = vld [vmem:[%s207 + $0x870] sm:$0xff]
      %v542 = vld [vmem:[%s207 + $0x878] sm:$0xff]
      %v543 = vld [vmem:[%s207 + $0x880] sm:$0xff]
      %v544 = vld [vmem:[%s207 + $0x888] sm:$0xff]
      %v545 = vld [vmem:[%s207 + $0x890] sm:$0xff]
      %v546 = vld [vmem:[%s207 + $0x898] sm:$0xff]
      %v547 = vld [vmem:[%s207 + $0x8a0] sm:$0xff]
      %v548 = vld [vmem:[%s207 + $0x8a8] sm:$0xff]
      %v549 = vld [vmem:[%s207 + $0x8b0] sm:$0xff]
      %v550 = vld [vmem:[%s207 + $0x8b8] sm:$0xff]
      %v551 = vld [vmem:[%s207 + $0x8c0] sm:$0xff]
      %v552 = vld [vmem:[%s207 + $0x8c8] sm:$0xff]
      %v553 = vld [vmem:[%s207 + $0x8d0] sm:$0xff]
      %v554 = vld [vmem:[%s207 + $0x8d8] sm:$0xff]
      %v555 = vld [vmem:[%s207 + $0x8e0] sm:$0xff]
      %v556 = vld [vmem:[%s207 + $0x8e8] sm:$0xff]
      %v557 = vld [vmem:[%s207 + $0x8f0] sm:$0xff]
      %v558 = vld [vmem:[%s207 + $0x8f8] sm:$0xff]
      %v559 = vld [vmem:[%s207 + $0x900] sm:$0xff]
      %v560 = vld [vmem:[%s207 + $0x908] sm:$0xff]
      %v561 = vld [vmem:[%s207 + $0x910] sm:$0xff]
      %v562 = vld [vmem:[%s207 + $0x918] sm:$0xff]
      %v563 = vld [vmem:[%s207 + $0x920] sm:$0xff]
      %v564 = vld [vmem:[%s207 + $0x928] sm:$0xff]
      %v565 = vld [vmem:[%s207 + $0x930] sm:$0xff]
      %v566 = vld [vmem:[%s207 + $0x938] sm:$0xff]
      %v567 = vld [vmem:[%s207 + $0x940] sm:$0xff]
      %v568 = vld [vmem:[%s207 + $0x948] sm:$0xff]
      %v569 = vld [vmem:[%s207 + $0x950] sm:$0xff]
      %v570 = vld [vmem:[%s207 + $0x958] sm:$0xff]
      %v571 = vld [vmem:[%s207 + $0x960] sm:$0xff]
      %v572 = vld [vmem:[%s207 + $0x968] sm:$0xff]
      %v573 = vld [vmem:[%s207 + $0x970] sm:$0xff]
      %v574 = vld [vmem:[%s207 + $0x978] sm:$0xff]
      %v575 = vld [vmem:[%s207 + $0x980] sm:$0xff]
      %v576 = vld [vmem:[%s207 + $0x988] sm:$0xff]
      %v577 = vld [vmem:[%s207 + $0x990] sm:$0xff]
      %v578 = vld [vmem:[%s207 + $0x998] sm:$0xff]
      %v579 = vld [vmem:[%s207 + $0x9a0] sm:$0xff]
      %v580 = vld [vmem:[%s207 + $0x9a8] sm:$0xff]
      %v581 = vld [vmem:[%s207 + $0x9b0] sm:$0xff]
      %v582 = vld [vmem:[%s207 + $0x9b8] sm:$0xff]
      %v583 = vld [vmem:[%s207 + $0x9c0] sm:$0xff]
      %v584 = vld [vmem:[%s207 + $0x9c8] sm:$0xff]
      %v585 = vld [vmem:[%s207 + $0x9d0] sm:$0xff]
      %v586 = vld [vmem:[%s207 + $0x9d8] sm:$0xff]
      %v587 = vld [vmem:[%s207 + $0x9e0] sm:$0xff]
      %v588 = vld [vmem:[%s207 + $0x9e8] sm:$0xff]
      %v589 = vld [vmem:[%s207 + $0x9f0] sm:$0xff]
      %v590 = vld [vmem:[%s207 + $0x9f8] sm:$0xff]
      %v591 = vld [vmem:[%s207 + $0xa00] sm:$0xff]
      %v592 = vld [vmem:[%s207 + $0xa08] sm:$0xff]
      %v593 = vld [vmem:[%s207 + $0xa10] sm:$0xff]
      %v594 = vld [vmem:[%s207 + $0xa18] sm:$0xff]
      %v595 = vld [vmem:[%s207 + $0xa20] sm:$0xff]
      %v596 = vld [vmem:[%s207 + $0xa28] sm:$0xff]
      %v597 = vld [vmem:[%s207 + $0xa30] sm:$0xff]
      %v598 = vld [vmem:[%s207 + $0xa38] sm:$0xff]
      %v599 = vld [vmem:[%s207 + $0xa40] sm:$0xff]
      %v600 = vld [vmem:[%s207 + $0xa48] sm:$0xff]
      %v601 = vld [vmem:[%s207 + $0xa50] sm:$0xff]
      %v602 = vld [vmem:[%s207 + $0xa58] sm:$0xff]
      %v603 = vld [vmem:[%s207 + $0xa60] sm:$0xff]
      %v604 = vld [vmem:[%s207 + $0xa68] sm:$0xff]
      %v605 = vld [vmem:[%s207 + $0xa70] sm:$0xff]
      %v606 = vld [vmem:[%s207 + $0xa78] sm:$0xff]
      %v607 = vld [vmem:[%s207 + $0xa80] sm:$0xff]
      %v608 = vld [vmem:[%s207 + $0xa88] sm:$0xff]
      %v609 = vld [vmem:[%s207 + $0xa90] sm:$0xff]
      %v610 = vld [vmem:[%s207 + $0xa98] sm:$0xff]
      %v611 = vld [vmem:[%s207 + $0xaa0] sm:$0xff]
      %v612 = vld [vmem:[%s207 + $0xaa8] sm:$0xff]
      %v613 = vld [vmem:[%s207 + $0xab0] sm:$0xff]
      %v614 = vld [vmem:[%s207 + $0xab8] sm:$0xff]
      %v615 = vld [vmem:[%s207 + $0xac0] sm:$0xff]
      %v616 = vld [vmem:[%s207 + $0xac8] sm:$0xff]
      %v617 = vld [vmem:[%s207 + $0xad0] sm:$0xff]
      %v618 = vld [vmem:[%s207 + $0xad8] sm:$0xff]
      %v619 = vld [vmem:[%s207 + $0xae0] sm:$0xff]
      %v620 = vld [vmem:[%s207 + $0xae8] sm:$0xff]
      %v621 = vld [vmem:[%s207 + $0xaf0] sm:$0xff]
      %v622 = vld [vmem:[%s207 + $0xaf8] sm:$0xff]
      %v623 = vld [vmem:[%s207 + $0xb00] sm:$0xff]
      %v624 = vld [vmem:[%s207 + $0xb08] sm:$0xff]
      %v625 = vld [vmem:[%s207 + $0xb10] sm:$0xff]
      %v626 = vld [vmem:[%s207 + $0xb18] sm:$0xff]
      %v627 = vld [vmem:[%s207 + $0xb20] sm:$0xff]
      %v628 = vld [vmem:[%s207 + $0xb28] sm:$0xff]
      %v629 = vld [vmem:[%s207 + $0xb30] sm:$0xff]
      %v630 = vld [vmem:[%s207 + $0xb38] sm:$0xff]
      %v631 = vld [vmem:[%s207 + $0xb40] sm:$0xff]
      %v632 = vld [vmem:[%s207 + $0xb48] sm:$0xff]
      %v633 = vld [vmem:[%s207 + $0xb50] sm:$0xff]
      %v634 = vld [vmem:[%s207 + $0xb58] sm:$0xff]
      %v635 = vld [vmem:[%s207 + $0xb60] sm:$0xff]
      %v636 = vld [vmem:[%s207 + $0xb68] sm:$0xff]
      %v637 = vld [vmem:[%s207 + $0xb70] sm:$0xff]
      %v638 = vld [vmem:[%s207 + $0xb78] sm:$0xff]
      %v639 = vld [vmem:[%s207 + $0xb80] sm:$0xff]
      %v640 = vld [vmem:[%s207 + $0xb88] sm:$0xff]
      %v641 = vld [vmem:[%s207 + $0xb90] sm:$0xff]
      %v642 = vld [vmem:[%s207 + $0xb98] sm:$0xff]
      %v643 = vld [vmem:[%s207 + $0xba0] sm:$0xff]
      %v644 = vld [vmem:[%s207 + $0xba8] sm:$0xff]
      %v645 = vld [vmem:[%s207 + $0xbb0] sm:$0xff]
      %v646 = vld [vmem:[%s207 + $0xbb8] sm:$0xff]
      %v647 = vld [vmem:[%s207 + $0xbc0] sm:$0xff]
      %v648 = vld [vmem:[%s207 + $0xbc8] sm:$0xff]
      %v649 = vld [vmem:[%s207 + $0xbd0] sm:$0xff]
      %v650 = vld [vmem:[%s207 + $0xbd8] sm:$0xff]
      %v651 = vld [vmem:[%s207 + $0xbe0] sm:$0xff]
      %v652 = vld [vmem:[%s207 + $0xbe8] sm:$0xff]
      %v653 = vld [vmem:[%s207 + $0xbf0] sm:$0xff]
      %v654 = vld [vmem:[%s207 + $0xbf8] sm:$0xff]
      %v655 = vld [vmem:[%s207 + $0xc00] sm:$0xff]
      %v656 = vld [vmem:[%s207 + $0xc08] sm:$0xff]
      %v657 = vld [vmem:[%s207 + $0xc10] sm:$0xff]
      %v658 = vld [vmem:[%s207 + $0xc18] sm:$0xff]
      %v659 = vld [vmem:[%s207 + $0xc20] sm:$0xff]
      %v660 = vld [vmem:[%s207 + $0xc28] sm:$0xff]
      %v661 = vld [vmem:[%s207 + $0xc30] sm:$0xff]
      %v662 = vld [vmem:[%s207 + $0xc38] sm:$0xff]
      %v663 = vld [vmem:[%s207 + $0xc40] sm:$0xff]
      %v664 = vld [vmem:[%s207 + $0xc48] sm:$0xff]
      %v665 = vld [vmem:[%s207 + $0xc50] sm:$0xff]
      %v666 = vld [vmem:[%s207 + $0xc58] sm:$0xff]
      %v667 = vld [vmem:[%s207 + $0xc60] sm:$0xff]
      %v668 = vld [vmem:[%s207 + $0xc68] sm:$0xff]
      %v669 = vld [vmem:[%s207 + $0xc70] sm:$0xff]
      %v670 = vld [vmem:[%s207 + $0xc78] sm:$0xff]
      %v671 = vld [vmem:[%s207 + $0xc80] sm:$0xff]
      %v672 = vld [vmem:[%s207 + $0xc88] sm:$0xff]
      %v673 = vld [vmem:[%s207 + $0xc90] sm:$0xff]
      %v674 = vld [vmem:[%s207 + $0xc98] sm:$0xff]
      %v675 = vld [vmem:[%s207 + $0xca0] sm:$0xff]
      %v676 = vld [vmem:[%s207 + $0xca8] sm:$0xff]
      %v677 = vld [vmem:[%s207 + $0xcb0] sm:$0xff]
      %v678 = vld [vmem:[%s207 + $0xcb8] sm:$0xff]
      %v679 = vld [vmem:[%s207 + $0xcc0] sm:$0xff]
      %v680 = vld [vmem:[%s207 + $0xcc8] sm:$0xff]
      %v681 = vld [vmem:[%s207 + $0xcd0] sm:$0xff]
      %v682 = vld [vmem:[%s207 + $0xcd8] sm:$0xff]
      %v683 = vld [vmem:[%s207 + $0xce0] sm:$0xff]
      %v684 = vld [vmem:[%s207 + $0xce8] sm:$0xff]
      %v685 = vld [vmem:[%s207 + $0xcf0] sm:$0xff]
      %v686 = vld [vmem:[%s207 + $0xcf8] sm:$0xff]
      %v687 = vld [vmem:[%s207 + $0xd00] sm:$0xff]
      %v688 = vld [vmem:[%s207 + $0xd08] sm:$0xff]
      %v689 = vld [vmem:[%s207 + $0xd10] sm:$0xff]
      %v690 = vld [vmem:[%s207 + $0xd18] sm:$0xff]
      %v691 = vld [vmem:[%s207 + $0xd20] sm:$0xff]
      %v692 = vld [vmem:[%s207 + $0xd28] sm:$0xff]
      %v693 = vld [vmem:[%s207 + $0xd30] sm:$0xff]
      %v694 = vld [vmem:[%s207 + $0xd38] sm:$0xff]
      %v695 = vld [vmem:[%s207 + $0xd40] sm:$0xff]
      %v696 = vld [vmem:[%s207 + $0xd48] sm:$0xff]
      %v697 = vld [vmem:[%s207 + $0xd50] sm:$0xff]
      %v698 = vld [vmem:[%s207 + $0xd58] sm:$0xff]
      %v699 = vld [vmem:[%s207 + $0xd60] sm:$0xff]
      %v700 = vld [vmem:[%s207 + $0xd68] sm:$0xff]
      %v701 = vld [vmem:[%s207 + $0xd70] sm:$0xff]
      %v702 = vld [vmem:[%s207 + $0xd78] sm:$0xff]
      %v703 = vld [vmem:[%s207 + $0xd80] sm:$0xff]
      %v704 = vld [vmem:[%s207 + $0xd88] sm:$0xff]
      %v705 = vld [vmem:[%s207 + $0xd90] sm:$0xff]
      %v706 = vld [vmem:[%s207 + $0xd98] sm:$0xff]
      %v707 = vld [vmem:[%s207 + $0xda0] sm:$0xff]
      %v708 = vld [vmem:[%s207 + $0xda8] sm:$0xff]
      %v709 = vld [vmem:[%s207 + $0xdb0] sm:$0xff]
      %v710 = vld [vmem:[%s207 + $0xdb8] sm:$0xff]
      %v711 = vld [vmem:[%s207 + $0xdc0] sm:$0xff]
      %v712 = vld [vmem:[%s207 + $0xdc8] sm:$0xff]
      %v713 = vld [vmem:[%s207 + $0xdd0] sm:$0xff]
      %v714 = vld [vmem:[%s207 + $0xdd8] sm:$0xff]
      %v715 = vld [vmem:[%s207 + $0xde0] sm:$0xff]
      %v716 = vld [vmem:[%s207 + $0xde8] sm:$0xff]
      %v717 = vld [vmem:[%s207 + $0xdf0] sm:$0xff]
      %v718 = vld [vmem:[%s207 + $0xdf8] sm:$0xff]
      %v719 = vld [vmem:[%s207 + $0xe00] sm:$0xff]
      %v720 = vld [vmem:[%s207 + $0xe08] sm:$0xff]
      %v721 = vld [vmem:[%s207 + $0xe10] sm:$0xff]
      %v722 = vld [vmem:[%s207 + $0xe18] sm:$0xff]
      %v723 = vld [vmem:[%s207 + $0xe20] sm:$0xff]
      %v724 = vld [vmem:[%s207 + $0xe28] sm:$0xff]
      %v725 = vld [vmem:[%s207 + $0xe30] sm:$0xff]
      %v726 = vld [vmem:[%s207 + $0xe38] sm:$0xff]
      %v727 = vld [vmem:[%s207 + $0xe40] sm:$0xff]
      %v728 = vld [vmem:[%s207 + $0xe48] sm:$0xff]
      %v729 = vld [vmem:[%s207 + $0xe50] sm:$0xff]
      %v730 = vld [vmem:[%s207 + $0xe58] sm:$0xff]
      %v731 = vld [vmem:[%s207 + $0xe60] sm:$0xff]
      %v732 = vld [vmem:[%s207 + $0xe68] sm:$0xff]
      %v733 = vld [vmem:[%s207 + $0xe70] sm:$0xff]
      %v734 = vld [vmem:[%s207 + $0xe78] sm:$0xff]
      %v735 = vld [vmem:[%s207 + $0xe80] sm:$0xff]
      %v736 = vld [vmem:[%s207 + $0xe88] sm:$0xff]
      %v737 = vld [vmem:[%s207 + $0xe90] sm:$0xff]
      %v738 = vld [vmem:[%s207 + $0xe98] sm:$0xff]
      %v739 = vld [vmem:[%s207 + $0xea0] sm:$0xff]
      %v740 = vld [vmem:[%s207 + $0xea8] sm:$0xff]
      %v741 = vld [vmem:[%s207 + $0xeb0] sm:$0xff]
      %v742 = vld [vmem:[%s207 + $0xeb8] sm:$0xff]
      %v743 = vld [vmem:[%s207 + $0xec0] sm:$0xff]
      %v744 = vld [vmem:[%s207 + $0xec8] sm:$0xff]
      %v745 = vld [vmem:[%s207 + $0xed0] sm:$0xff]
      %v746 = vld [vmem:[%s207 + $0xed8] sm:$0xff]
      %v747 = vld [vmem:[%s207 + $0xee0] sm:$0xff]
      %v748 = vld [vmem:[%s207 + $0xee8] sm:$0xff]
      %v749 = vld [vmem:[%s207 + $0xef0] sm:$0xff]
      %v750 = vld [vmem:[%s207 + $0xef8] sm:$0xff]
      %v751 = vld [vmem:[%s207 + $0xf00] sm:$0xff]
      %v752 = vld [vmem:[%s207 + $0xf08] sm:$0xff]
      %v753 = vld [vmem:[%s207 + $0xf10] sm:$0xff]
      %v754 = vld [vmem:[%s207 + $0xf18] sm:$0xff]
      %v755 = vld [vmem:[%s207 + $0xf20] sm:$0xff]
      %v756 = vld [vmem:[%s207 + $0xf28] sm:$0xff]
      %v757 = vld [vmem:[%s207 + $0xf30] sm:$0xff]
      %v758 = vld [vmem:[%s207 + $0xf38] sm:$0xff]
      %v759 = vld [vmem:[%s207 + $0xf40] sm:$0xff]
      %v760 = vld [vmem:[%s207 + $0xf48] sm:$0xff]
      %v761 = vld [vmem:[%s207 + $0xf50] sm:$0xff]
      %v762 = vld [vmem:[%s207 + $0xf58] sm:$0xff]
      %v763 = vld [vmem:[%s207 + $0xf60] sm:$0xff]
      %v764 = vld [vmem:[%s207 + $0xf68] sm:$0xff]
      %v765 = vld [vmem:[%s207 + $0xf70] sm:$0xff]
      %v766 = vld [vmem:[%s207 + $0xf78] sm:$0xff]
      %v767 = vld [vmem:[%s207 + $0xf80] sm:$0xff]
      %v768 = vld [vmem:[%s207 + $0xf88] sm:$0xff]
      %v769 = vld [vmem:[%s207 + $0xf90] sm:$0xff]
      %v770 = vld [vmem:[%s207 + $0xf98] sm:$0xff]
      %v771 = vld [vmem:[%s207 + $0xfa0] sm:$0xff]
      %v772 = vld [vmem:[%s207 + $0xfa8] sm:$0xff]
      %v773 = vld [vmem:[%s207 + $0xfb0] sm:$0xff]
      %v774 = vld [vmem:[%s207 + $0xfb8] sm:$0xff]
      %v775 = vld [vmem:[%s207 + $0xfc0] sm:$0xff]
      %v776 = vld [vmem:[%s207 + $0xfc8] sm:$0xff]
      %v777 = vld [vmem:[%s207 + $0xfd0] sm:$0xff]
      %v778 = vld [vmem:[%s207 + $0xfd8] sm:$0xff]
      %v779 = vld [vmem:[%s207 + $0xfe0] sm:$0xff]
      %v780 = vld [vmem:[%s207 + $0xfe8] sm:$0xff]
      %v781 = vld [vmem:[%s207 + $0xff0] sm:$0xff]
      %v782 = vld [vmem:[%s207 + $0xff8] sm:$0xff]
      %783 = vmatprep.subr.mxu0 %v302
      %784 = vmatpush1.msra.mxu0 %v301
      %785 = vmatprep.subr.mxu0 %v300
      %786 = vmatpush1.msra.mxu0 %v299
      %787 = vmatprep.subr.mxu0 %v298
      %788 = vmatpush1.msra.mxu0 %v297
      %789 = vmatprep.subr.mxu0 %v296
      %790 = vmatpush1.msra.mxu0 %v295
      %791 = vmatprep.subr.mxu0 %v294
      %792 = vmatpush1.msra.mxu0 %v293
      %793 = vmatprep.subr.mxu0 %v292
      %794 = vmatpush1.msra.mxu0 %v291
      %795 = vmatprep.subr.mxu0 %v290
      %796 = vmatpush1.msra.mxu0 %v289
      %797 = vmatprep.subr.mxu0 %v288
      %798 = vmatpush1.msra.mxu0 %v287
      %799 = vmatprep.subr.mxu0 %v286
      %800 = vmatpush1.msra.mxu0 %v285
      %801 = vmatprep.subr.mxu0 %v284
      %802 = vmatpush1.msra.mxu0 %v283
      %803 = vmatprep.subr.mxu0 %v282
      %804 = vmatpush1.msra.mxu0 %v281
      %805 = vmatprep.subr.mxu0 %v280
      %806 = vmatpush1.msra.mxu0 %v279
      %807 = vmatprep.subr.mxu0 %v278
      %808 = vmatpush1.msra.mxu0 %v277
      %809 = vmatprep.subr.mxu0 %v276
      %810 = vmatpush1.msra.mxu0 %v275
      %811 = vmatprep.subr.mxu0 %v274
      %812 = vmatpush1.msra.mxu0 %v273
      %813 = vmatprep.subr.mxu0 %v272
      %814 = vmatpush1.msra.mxu0 %v271
      %815 = vmatprep.subr.mxu0 %v334
      %816 = vmatpush2.msra.mxu0 %v333
      %817 = vmatprep.subr.mxu0 %v332
      %818 = vmatpush2.msra.mxu0 %v331
      %819 = vmatprep.subr.mxu0 %v330
      %820 = vmatpush2.msra.mxu0 %v329
      %821 = vmatprep.subr.mxu0 %v328
      %822 = vmatpush2.msra.mxu0 %v327
      %823 = vmatprep.subr.mxu0 %v326
      %824 = vmatpush2.msra.mxu0 %v325
      %825 = vmatprep.subr.mxu0 %v324
      %826 = vmatpush2.msra.mxu0 %v323
      %827 = vmatprep.subr.mxu0 %v322
      %828 = vmatpush2.msra.mxu0 %v321
      %829 = vmatprep.subr.mxu0 %v320
      %830 = vmatpush2.msra.mxu0 %v319
      %831 = vmatprep.subr.mxu0 %v318
      %832 = vmatpush2.msra.mxu0 %v317
      %833 = vmatprep.subr.mxu0 %v316
      %834 = vmatpush2.msra.mxu0 %v315
      %835 = vmatprep.subr.mxu0 %v314
      %836 = vmatpush2.msra.mxu0 %v313
      %837 = vmatprep.subr.mxu0 %v312
      %838 = vmatpush2.msra.mxu0 %v311
      %839 = vmatprep.subr.mxu0 %v310
      %840 = vmatpush2.msra.mxu0 %v309
      %841 = vmatprep.subr.mxu0 %v308
      %842 = vmatpush2.msra.mxu0 %v307
      %843 = vmatprep.subr.mxu0 %v306
      %844 = vmatpush2.msra.mxu0 %v305
      %845 = vmatprep.subr.mxu0 %v304
      %846 = vmatpush2.msra.mxu0 %v303
      %847 = vmatprep.mubr.f32.mxu0 %v224
      %848 = vmatmul.mubr.f32.gmra.mxu0 %v223
      %v849 = vpop.f32.mrf.mxu0
      %v850 = vadd.f32 0.0, %v849
      %v851 = vpop.f32.mrf.mxu0
      %v852 = vadd.f32 0.0, %v851
      %853 = vmatprep.mubr.f32.mxu0 %v240
      %854 = vmatmul.mubr.f32.gmra.mxu0 %v239
      %v855 = vpop.f32.mrf.mxu0
      %v856 = vadd.f32 0.0, %v855
      %v857 = vpop.f32.mrf.mxu0
      %v858 = vadd.f32 0.0, %v857
      %859 = vmatprep.mubr.f32.mxu0 %v256
      %860 = vmatmul.mubr.f32.gmra.mxu0 %v255
      %v861 = vpop.f32.mrf.mxu0
      %v862 = vadd.f32 0.0, %v861
      %v863 = vpop.f32.mrf.mxu0
      %v864 = vadd.f32 0.0, %v863
      %865 = vdwg.mxu0
      %866 = vmatprep.subr.mxu0 %v366
      %867 = vmatpush1.msra.mxu0 %v365
      %868 = vmatprep.subr.mxu0 %v364
      %869 = vmatpush1.msra.mxu0 %v363
      %870 = vmatprep.subr.mxu0 %v362
      %871 = vmatpush1.msra.mxu0 %v361
      %872 = vmatprep.subr.mxu0 %v360
      %873 = vmatpush1.msra.mxu0 %v359
      %874 = vmatprep.subr.mxu0 %v358
      %875 = vmatpush1.msra.mxu0 %v357
      %876 = vmatprep.subr.mxu0 %v356
      %877 = vmatpush1.msra.mxu0 %v355
      %878 = vmatprep.subr.mxu0 %v354
      %879 = vmatpush1.msra.mxu0 %v353
      %880 = vmatprep.subr.mxu0 %v352
      %881 = vmatpush1.msra.mxu0 %v351
      %882 = vmatprep.subr.mxu0 %v350
      %883 = vmatpush1.msra.mxu0 %v349
      %884 = vmatprep.subr.mxu0 %v348
      %885 = vmatpush1.msra.mxu0 %v347
      %886 = vmatprep.subr.mxu0 %v346
      %887 = vmatpush1.msra.mxu0 %v345
      %888 = vmatprep.subr.mxu0 %v344
      %889 = vmatpush1.msra.mxu0 %v343
      %890 = vmatprep.subr.mxu0 %v342
      %891 = vmatpush1.msra.mxu0 %v341
      %892 = vmatprep.subr.mxu0 %v340
      %893 = vmatpush1.msra.mxu0 %v339
      %894 = vmatprep.subr.mxu0 %v338
      %895 = vmatpush1.msra.mxu0 %v337
      %896 = vmatprep.subr.mxu0 %v336
      %897 = vmatpush1.msra.mxu0 %v335
      %898 = vmatprep.subr.mxu0 %v398
      %899 = vmatpush2.msra.mxu0 %v397
      %900 = vmatprep.subr.mxu0 %v396
      %901 = vmatpush2.msra.mxu0 %v395
      %902 = vmatprep.subr.mxu0 %v394
      %903 = vmatpush2.msra.mxu0 %v393
      %904 = vmatprep.subr.mxu0 %v392
      %905 = vmatpush2.msra.mxu0 %v391
      %906 = vmatprep.subr.mxu0 %v390
      %907 = vmatpush2.msra.mxu0 %v389
      %908 = vmatprep.subr.mxu0 %v388
      %909 = vmatpush2.msra.mxu0 %v387
      %910 = vmatprep.subr.mxu0 %v386
      %911 = vmatpush2.msra.mxu0 %v385
      %912 = vmatprep.subr.mxu0 %v384
      %913 = vmatpush2.msra.mxu0 %v383
      %914 = vmatprep.subr.mxu0 %v382
      %915 = vmatpush2.msra.mxu0 %v381
      %916 = vmatprep.subr.mxu0 %v380
      %917 = vmatpush2.msra.mxu0 %v379
      %918 = vmatprep.subr.mxu0 %v378
      %919 = vmatpush2.msra.mxu0 %v377
      %920 = vmatprep.subr.mxu0 %v376
      %921 = vmatpush2.msra.mxu0 %v375
      %922 = vmatprep.subr.mxu0 %v374
      %923 = vmatpush2.msra.mxu0 %v373
      %924 = vmatprep.subr.mxu0 %v372
      %925 = vmatpush2.msra.mxu0 %v371
      %926 = vmatprep.subr.mxu0 %v370
      %927 = vmatpush2.msra.mxu0 %v369
      %928 = vmatprep.subr.mxu0 %v368
      %929 = vmatpush2.msra.mxu0 %v367
      %930 = vmatprep.mubr.f32.mxu0 %v226
      %931 = vmatmul.mubr.f32.gmra.mxu0 %v225
      %v932 = vpop.f32.mrf.mxu0
      %v933 = vadd.f32 %v850, %v932
      %v934 = vpop.f32.mrf.mxu0
      %v935 = vadd.f32 %v852, %v934
      %936 = vmatprep.mubr.f32.mxu0 %v242
      %937 = vmatmul.mubr.f32.gmra.mxu0 %v241
      %v938 = vpop.f32.mrf.mxu0
      %v939 = vadd.f32 %v856, %v938
      %v940 = vpop.f32.mrf.mxu0
      %v941 = vadd.f32 %v858, %v940
      %942 = vmatprep.mubr.f32.mxu0 %v258
      %943 = vmatmul.mubr.f32.gmra.mxu0 %v257
      %v944 = vpop.f32.mrf.mxu0
      %v945 = vadd.f32 %v862, %v944
      %v946 = vpop.f32.mrf.mxu0
      %v947 = vadd.f32 %v864, %v946
      %948 = vdwg.mxu0
      %949 = vmatprep.subr.mxu0 %v430
      %950 = vmatpush1.msra.mxu0 %v429
      %951 = vmatprep.subr.mxu0 %v428
      %952 = vmatpush1.msra.mxu0 %v427
      %953 = vmatprep.subr.mxu0 %v426
      %954 = vmatpush1.msra.mxu0 %v425
      %955 = vmatprep.subr.mxu0 %v424
      %956 = vmatpush1.msra.mxu0 %v423
      %957 = vmatprep.subr.mxu0 %v422
      %958 = vmatpush1.msra.mxu0 %v421
      %959 = vmatprep.subr.mxu0 %v420
      %960 = vmatpush1.msra.mxu0 %v419
      %961 = vmatprep.subr.mxu0 %v418
      %962 = vmatpush1.msra.mxu0 %v417
      %963 = vmatprep.subr.mxu0 %v416
      %964 = vmatpush1.msra.mxu0 %v415
      %965 = vmatprep.subr.mxu0 %v414
      %966 = vmatpush1.msra.mxu0 %v413
      %967 = vmatprep.subr.mxu0 %v412
      %968 = vmatpush1.msra.mxu0 %v411
      %969 = vmatprep.subr.mxu0 %v410
      %970 = vmatpush1.msra.mxu0 %v409
      %971 = vmatprep.subr.mxu0 %v408
      %972 = vmatpush1.msra.mxu0 %v407
      %973 = vmatprep.subr.mxu0 %v406
      %974 = vmatpush1.msra.mxu0 %v405
      %975 = vmatprep.subr.mxu0 %v404
      %976 = vmatpush1.msra.mxu0 %v403
      %977 = vmatprep.subr.mxu0 %v402
      %978 = vmatpush1.msra.mxu0 %v401
      %979 = vmatprep.subr.mxu0 %v400
      %980 = vmatpush1.msra.mxu0 %v399
      %981 = vmatprep.subr.mxu0 %v462
      %982 = vmatpush2.msra.mxu0 %v461
      %983 = vmatprep.subr.mxu0 %v460
      %984 = vmatpush2.msra.mxu0 %v459
      %985 = vmatprep.subr.mxu0 %v458
      %986 = vmatpush2.msra.mxu0 %v457
      %987 = vmatprep.subr.mxu0 %v456
      %988 = vmatpush2.msra.mxu0 %v455
      %989 = vmatprep.subr.mxu0 %v454
      %990 = vmatpush2.msra.mxu0 %v453
      %991 = vmatprep.subr.mxu0 %v452
      %992 = vmatpush2.msra.mxu0 %v451
      %993 = vmatprep.subr.mxu0 %v450
      %994 = vmatpush2.msra.mxu0 %v449
      %995 = vmatprep.subr.mxu0 %v448
      %996 = vmatpush2.msra.mxu0 %v447
      %997 = vmatprep.subr.mxu0 %v446
      %998 = vmatpush2.msra.mxu0 %v445
      %999 = vmatprep.subr.mxu0 %v444
      %1000 = vmatpush2.msra.mxu0 %v443
      %1001 = vmatprep.subr.mxu0 %v442
      %1002 = vmatpush2.msra.mxu0 %v441
      %1003 = vmatprep.subr.mxu0 %v440
      %1004 = vmatpush2.msra.mxu0 %v439
      %1005 = vmatprep.subr.mxu0 %v438
      %1006 = vmatpush2.msra.mxu0 %v437
      %1007 = vmatprep.subr.mxu0 %v436
      %1008 = vmatpush2.msra.mxu0 %v435
      %1009 = vmatprep.subr.mxu0 %v434
      %1010 = vmatpush2.msra.mxu0 %v433
      %1011 = vmatprep.subr.mxu0 %v432
      %1012 = vmatpush2.msra.mxu0 %v431
      %1013 = vmatprep.mubr.f32.mxu0 %v228
      %1014 = vmatmul.mubr.f32.gmra.mxu0 %v227
      %v1015 = vpop.f32.mrf.mxu0
      %v1016 = vadd.f32 %v933, %v1015
      %v1017 = vpop.f32.mrf.mxu0
      %v1018 = vadd.f32 %v935, %v1017
      %1019 = vmatprep.mubr.f32.mxu0 %v244
      %1020 = vmatmul.mubr.f32.gmra.mxu0 %v243
      %v1021 = vpop.f32.mrf.mxu0
      %v1022 = vadd.f32 %v939, %v1021
      %v1023 = vpop.f32.mrf.mxu0
      %v1024 = vadd.f32 %v941, %v1023
      %1025 = vmatprep.mubr.f32.mxu0 %v260
      %1026 = vmatmul.mubr.f32.gmra.mxu0 %v259
      %v1027 = vpop.f32.mrf.mxu0
      %v1028 = vadd.f32 %v945, %v1027
      %v1029 = vpop.f32.mrf.mxu0
      %v1030 = vadd.f32 %v947, %v1029
      %1031 = vdwg.mxu0
      %1032 = vmatprep.subr.mxu0 %v494
      %1033 = vmatpush1.msra.mxu0 %v493
      %1034 = vmatprep.subr.mxu0 %v492
      %1035 = vmatpush1.msra.mxu0 %v491
      %1036 = vmatprep.subr.mxu0 %v490
      %1037 = vmatpush1.msra.mxu0 %v489
      %1038 = vmatprep.subr.mxu0 %v488
      %1039 = vmatpush1.msra.mxu0 %v487
      %1040 = vmatprep.subr.mxu0 %v486
      %1041 = vmatpush1.msra.mxu0 %v485
      %1042 = vmatprep.subr.mxu0 %v484
      %1043 = vmatpush1.msra.mxu0 %v483
      %1044 = vmatprep.subr.mxu0 %v482
      %1045 = vmatpush1.msra.mxu0 %v481
      %1046 = vmatprep.subr.mxu0 %v480
      %1047 = vmatpush1.msra.mxu0 %v479
      %1048 = vmatprep.subr.mxu0 %v478
      %1049 = vmatpush1.msra.mxu0 %v477
      %1050 = vmatprep.subr.mxu0 %v476
      %1051 = vmatpush1.msra.mxu0 %v475
      %1052 = vmatprep.subr.mxu0 %v474
      %1053 = vmatpush1.msra.mxu0 %v473
      %1054 = vmatprep.subr.mxu0 %v472
      %1055 = vmatpush1.msra.mxu0 %v471
      %1056 = vmatprep.subr.mxu0 %v470
      %1057 = vmatpush1.msra.mxu0 %v469
      %1058 = vmatprep.subr.mxu0 %v468
      %1059 = vmatpush1.msra.mxu0 %v467
      %1060 = vmatprep.subr.mxu0 %v466
      %1061 = vmatpush1.msra.mxu0 %v465
      %1062 = vmatprep.subr.mxu0 %v464
      %1063 = vmatpush1.msra.mxu0 %v463
      %1064 = vmatprep.subr.mxu0 %v526
      %1065 = vmatpush2.msra.mxu0 %v525
      %1066 = vmatprep.subr.mxu0 %v524
      %1067 = vmatpush2.msra.mxu0 %v523
      %1068 = vmatprep.subr.mxu0 %v522
      %1069 = vmatpush2.msra.mxu0 %v521
      %1070 = vmatprep.subr.mxu0 %v520
      %1071 = vmatpush2.msra.mxu0 %v519
      %1072 = vmatprep.subr.mxu0 %v518
      %1073 = vmatpush2.msra.mxu0 %v517
      %1074 = vmatprep.subr.mxu0 %v516
      %1075 = vmatpush2.msra.mxu0 %v515
      %1076 = vmatprep.subr.mxu0 %v514
      %1077 = vmatpush2.msra.mxu0 %v513
      %1078 = vmatprep.subr.mxu0 %v512
      %1079 = vmatpush2.msra.mxu0 %v511
      %1080 = vmatprep.subr.mxu0 %v510
      %1081 = vmatpush2.msra.mxu0 %v509
      %1082 = vmatprep.subr.mxu0 %v508
      %1083 = vmatpush2.msra.mxu0 %v507
      %1084 = vmatprep.subr.mxu0 %v506
      %1085 = vmatpush2.msra.mxu0 %v505
      %1086 = vmatprep.subr.mxu0 %v504
      %1087 = vmatpush2.msra.mxu0 %v503
      %1088 = vmatprep.subr.mxu0 %v502
      %1089 = vmatpush2.msra.mxu0 %v501
      %1090 = vmatprep.subr.mxu0 %v500
      %1091 = vmatpush2.msra.mxu0 %v499
      %1092 = vmatprep.subr.mxu0 %v498
      %1093 = vmatpush2.msra.mxu0 %v497
      %1094 = vmatprep.subr.mxu0 %v496
      %1095 = vmatpush2.msra.mxu0 %v495
      %1096 = vmatprep.mubr.f32.mxu0 %v230
      %1097 = vmatmul.mubr.f32.gmra.mxu0 %v229
      %v1098 = vpop.f32.mrf.mxu0
      %v1099 = vadd.f32 %v1016, %v1098
      %v1100 = vpop.f32.mrf.mxu0
      %v1101 = vadd.f32 %v1018, %v1100
      %1102 = vmatprep.mubr.f32.mxu0 %v246
      %1103 = vmatmul.mubr.f32.gmra.mxu0 %v245
      %v1104 = vpop.f32.mrf.mxu0
      %v1105 = vadd.f32 %v1022, %v1104
      %v1106 = vpop.f32.mrf.mxu0
      %v1107 = vadd.f32 %v1024, %v1106
      %1108 = vmatprep.mubr.f32.mxu0 %v262
      %1109 = vmatmul.mubr.f32.gmra.mxu0 %v261
      %v1110 = vpop.f32.mrf.mxu0
      %v1111 = vadd.f32 %v1028, %v1110
      %v1112 = vpop.f32.mrf.mxu0
      %v1113 = vadd.f32 %v1030, %v1112
      %1114 = vdwg.mxu0
      %1115 = vmatprep.subr.mxu0 %v558
      %1116 = vmatpush1.msra.mxu0 %v557
      %1117 = vmatprep.subr.mxu0 %v556
      %1118 = vmatpush1.msra.mxu0 %v555
      %1119 = vmatprep.subr.mxu0 %v554
      %1120 = vmatpush1.msra.mxu0 %v553
      %1121 = vmatprep.subr.mxu0 %v552
      %1122 = vmatpush1.msra.mxu0 %v551
      %1123 = vmatprep.subr.mxu0 %v550
      %1124 = vmatpush1.msra.mxu0 %v549
      %1125 = vmatprep.subr.mxu0 %v548
      %1126 = vmatpush1.msra.mxu0 %v547
      %1127 = vmatprep.subr.mxu0 %v546
      %1128 = vmatpush1.msra.mxu0 %v545
      %1129 = vmatprep.subr.mxu0 %v544
      %1130 = vmatpush1.msra.mxu0 %v543
      %1131 = vmatprep.subr.mxu0 %v542
      %1132 = vmatpush1.msra.mxu0 %v541
      %1133 = vmatprep.subr.mxu0 %v540
      %1134 = vmatpush1.msra.mxu0 %v539
      %1135 = vmatprep.subr.mxu0 %v538
      %1136 = vmatpush1.msra.mxu0 %v537
      %1137 = vmatprep.subr.mxu0 %v536
      %1138 = vmatpush1.msra.mxu0 %v535
      %1139 = vmatprep.subr.mxu0 %v534
      %1140 = vmatpush1.msra.mxu0 %v533
      %1141 = vmatprep.subr.mxu0 %v532
      %1142 = vmatpush1.msra.mxu0 %v531
      %1143 = vmatprep.subr.mxu0 %v530
      %1144 = vmatpush1.msra.mxu0 %v529
      %1145 = vmatprep.subr.mxu0 %v528
      %1146 = vmatpush1.msra.mxu0 %v527
      %1147 = vmatprep.subr.mxu0 %v590
      %1148 = vmatpush2.msra.mxu0 %v589
      %1149 = vmatprep.subr.mxu0 %v588
      %1150 = vmatpush2.msra.mxu0 %v587
      %1151 = vmatprep.subr.mxu0 %v586
      %1152 = vmatpush2.msra.mxu0 %v585
      %1153 = vmatprep.subr.mxu0 %v584
      %1154 = vmatpush2.msra.mxu0 %v583
      %1155 = vmatprep.subr.mxu0 %v582
      %1156 = vmatpush2.msra.mxu0 %v581
      %1157 = vmatprep.subr.mxu0 %v580
      %1158 = vmatpush2.msra.mxu0 %v579
      %1159 = vmatprep.subr.mxu0 %v578
      %1160 = vmatpush2.msra.mxu0 %v577
      %1161 = vmatprep.subr.mxu0 %v576
      %1162 = vmatpush2.msra.mxu0 %v575
      %1163 = vmatprep.subr.mxu0 %v574
      %1164 = vmatpush2.msra.mxu0 %v573
      %1165 = vmatprep.subr.mxu0 %v572
      %1166 = vmatpush2.msra.mxu0 %v571
      %1167 = vmatprep.subr.mxu0 %v570
      %1168 = vmatpush2.msra.mxu0 %v569
      %1169 = vmatprep.subr.mxu0 %v568
      %1170 = vmatpush2.msra.mxu0 %v567
      %1171 = vmatprep.subr.mxu0 %v566
      %1172 = vmatpush2.msra.mxu0 %v565
      %1173 = vmatprep.subr.mxu0 %v564
      %1174 = vmatpush2.msra.mxu0 %v563
      %1175 = vmatprep.subr.mxu0 %v562
      %1176 = vmatpush2.msra.mxu0 %v561
      %1177 = vmatprep.subr.mxu0 %v560
      %1178 = vmatpush2.msra.mxu0 %v559
      %1179 = vmatprep.mubr.f32.mxu0 %v232
      %1180 = vmatmul.mubr.f32.gmra.mxu0 %v231
      %v1181 = vpop.f32.mrf.mxu0
      %v1182 = vadd.f32 %v1099, %v1181
      %v1183 = vpop.f32.mrf.mxu0
      %v1184 = vadd.f32 %v1101, %v1183
      %1185 = vmatprep.mubr.f32.mxu0 %v248
      %1186 = vmatmul.mubr.f32.gmra.mxu0 %v247
      %v1187 = vpop.f32.mrf.mxu0
      %v1188 = vadd.f32 %v1105, %v1187
      %v1189 = vpop.f32.mrf.mxu0
      %v1190 = vadd.f32 %v1107, %v1189
      %1191 = vmatprep.mubr.f32.mxu0 %v264
      %1192 = vmatmul.mubr.f32.gmra.mxu0 %v263
      %v1193 = vpop.f32.mrf.mxu0
      %v1194 = vadd.f32 %v1111, %v1193
      %v1195 = vpop.f32.mrf.mxu0
      %v1196 = vadd.f32 %v1113, %v1195
      %1197 = vdwg.mxu0
      %1198 = vmatprep.subr.mxu0 %v622
      %1199 = vmatpush1.msra.mxu0 %v621
      %1200 = vmatprep.subr.mxu0 %v620
      %1201 = vmatpush1.msra.mxu0 %v619
      %1202 = vmatprep.subr.mxu0 %v618
      %1203 = vmatpush1.msra.mxu0 %v617
      %1204 = vmatprep.subr.mxu0 %v616
      %1205 = vmatpush1.msra.mxu0 %v615
      %1206 = vmatprep.subr.mxu0 %v614
      %1207 = vmatpush1.msra.mxu0 %v613
      %1208 = vmatprep.subr.mxu0 %v612
      %1209 = vmatpush1.msra.mxu0 %v611
      %1210 = vmatprep.subr.mxu0 %v610
      %1211 = vmatpush1.msra.mxu0 %v609
      %1212 = vmatprep.subr.mxu0 %v608
      %1213 = vmatpush1.msra.mxu0 %v607
      %1214 = vmatprep.subr.mxu0 %v606
      %1215 = vmatpush1.msra.mxu0 %v605
      %1216 = vmatprep.subr.mxu0 %v604
      %1217 = vmatpush1.msra.mxu0 %v603
      %1218 = vmatprep.subr.mxu0 %v602
      %1219 = vmatpush1.msra.mxu0 %v601
      %1220 = vmatprep.subr.mxu0 %v600
      %1221 = vmatpush1.msra.mxu0 %v599
      %1222 = vmatprep.subr.mxu0 %v598
      %1223 = vmatpush1.msra.mxu0 %v597
      %1224 = vmatprep.subr.mxu0 %v596
      %1225 = vmatpush1.msra.mxu0 %v595
      %1226 = vmatprep.subr.mxu0 %v594
      %1227 = vmatpush1.msra.mxu0 %v593
      %1228 = vmatprep.subr.mxu0 %v592
      %1229 = vmatpush1.msra.mxu0 %v591
      %1230 = vmatprep.subr.mxu0 %v654
      %1231 = vmatpush2.msra.mxu0 %v653
      %1232 = vmatprep.subr.mxu0 %v652
      %1233 = vmatpush2.msra.mxu0 %v651
      %1234 = vmatprep.subr.mxu0 %v650
      %1235 = vmatpush2.msra.mxu0 %v649
      %1236 = vmatprep.subr.mxu0 %v648
      %1237 = vmatpush2.msra.mxu0 %v647
      %1238 = vmatprep.subr.mxu0 %v646
      %1239 = vmatpush2.msra.mxu0 %v645
      %1240 = vmatprep.subr.mxu0 %v644
      %1241 = vmatpush2.msra.mxu0 %v643
      %1242 = vmatprep.subr.mxu0 %v642
      %1243 = vmatpush2.msra.mxu0 %v641
      %1244 = vmatprep.subr.mxu0 %v640
      %1245 = vmatpush2.msra.mxu0 %v639
      %1246 = vmatprep.subr.mxu0 %v638
      %1247 = vmatpush2.msra.mxu0 %v637
      %1248 = vmatprep.subr.mxu0 %v636
      %1249 = vmatpush2.msra.mxu0 %v635
      %1250 = vmatprep.subr.mxu0 %v634
      %1251 = vmatpush2.msra.mxu0 %v633
      %1252 = vmatprep.subr.mxu0 %v632
      %1253 = vmatpush2.msra.mxu0 %v631
      %1254 = vmatprep.subr.mxu0 %v630
      %1255 = vmatpush2.msra.mxu0 %v629
      %1256 = vmatprep.subr.mxu0 %v628
      %1257 = vmatpush2.msra.mxu0 %v627
      %1258 = vmatprep.subr.mxu0 %v626
      %1259 = vmatpush2.msra.mxu0 %v625
      %1260 = vmatprep.subr.mxu0 %v624
      %1261 = vmatpush2.msra.mxu0 %v623
      %1262 = vmatprep.mubr.f32.mxu0 %v234
      %1263 = vmatmul.mubr.f32.gmra.mxu0 %v233
      %v1264 = vpop.f32.mrf.mxu0
      %v1265 = vadd.f32 %v1182, %v1264
      %v1266 = vpop.f32.mrf.mxu0
      %v1267 = vadd.f32 %v1184, %v1266
      %1268 = vmatprep.mubr.f32.mxu0 %v250
      %1269 = vmatmul.mubr.f32.gmra.mxu0 %v249
      %v1270 = vpop.f32.mrf.mxu0
      %v1271 = vadd.f32 %v1188, %v1270
      %v1272 = vpop.f32.mrf.mxu0
      %v1273 = vadd.f32 %v1190, %v1272
      %1274 = vmatprep.mubr.f32.mxu0 %v266
      %1275 = vmatmul.mubr.f32.gmra.mxu0 %v265
      %v1276 = vpop.f32.mrf.mxu0
      %v1277 = vadd.f32 %v1194, %v1276
      %v1278 = vpop.f32.mrf.mxu0
      %v1279 = vadd.f32 %v1196, %v1278
      %1280 = vdwg.mxu0
      %1281 = vmatprep.subr.mxu0 %v686
      %1282 = vmatpush1.msra.mxu0 %v685
      %1283 = vmatprep.subr.mxu0 %v684
      %1284 = vmatpush1.msra.mxu0 %v683
      %1285 = vmatprep.subr.mxu0 %v682
      %1286 = vmatpush1.msra.mxu0 %v681
      %1287 = vmatprep.subr.mxu0 %v680
      %1288 = vmatpush1.msra.mxu0 %v679
      %1289 = vmatprep.subr.mxu0 %v678
      %1290 = vmatpush1.msra.mxu0 %v677
      %1291 = vmatprep.subr.mxu0 %v676
      %1292 = vmatpush1.msra.mxu0 %v675
      %1293 = vmatprep.subr.mxu0 %v674
      %1294 = vmatpush1.msra.mxu0 %v673
      %1295 = vmatprep.subr.mxu0 %v672
      %1296 = vmatpush1.msra.mxu0 %v671
      %1297 = vmatprep.subr.mxu0 %v670
      %1298 = vmatpush1.msra.mxu0 %v669
      %1299 = vmatprep.subr.mxu0 %v668
      %1300 = vmatpush1.msra.mxu0 %v667
      %1301 = vmatprep.subr.mxu0 %v666
      %1302 = vmatpush1.msra.mxu0 %v665
      %1303 = vmatprep.subr.mxu0 %v664
      %1304 = vmatpush1.msra.mxu0 %v663
      %1305 = vmatprep.subr.mxu0 %v662
      %1306 = vmatpush1.msra.mxu0 %v661
      %1307 = vmatprep.subr.mxu0 %v660
      %1308 = vmatpush1.msra.mxu0 %v659
      %1309 = vmatprep.subr.mxu0 %v658
      %1310 = vmatpush1.msra.mxu0 %v657
      %1311 = vmatprep.subr.mxu0 %v656
      %1312 = vmatpush1.msra.mxu0 %v655
      %1313 = vmatprep.subr.mxu0 %v718
      %1314 = vmatpush2.msra.mxu0 %v717
      %1315 = vmatprep.subr.mxu0 %v716
      %1316 = vmatpush2.msra.mxu0 %v715
      %1317 = vmatprep.subr.mxu0 %v714
      %1318 = vmatpush2.msra.mxu0 %v713
      %1319 = vmatprep.subr.mxu0 %v712
      %1320 = vmatpush2.msra.mxu0 %v711
      %1321 = vmatprep.subr.mxu0 %v710
      %1322 = vmatpush2.msra.mxu0 %v709
      %1323 = vmatprep.subr.mxu0 %v708
      %1324 = vmatpush2.msra.mxu0 %v707
      %1325 = vmatprep.subr.mxu0 %v706
      %1326 = vmatpush2.msra.mxu0 %v705
      %1327 = vmatprep.subr.mxu0 %v704
      %1328 = vmatpush2.msra.mxu0 %v703
      %1329 = vmatprep.subr.mxu0 %v702
      %1330 = vmatpush2.msra.mxu0 %v701
      %1331 = vmatprep.subr.mxu0 %v700
      %1332 = vmatpush2.msra.mxu0 %v699
      %1333 = vmatprep.subr.mxu0 %v698
      %1334 = vmatpush2.msra.mxu0 %v697
      %1335 = vmatprep.subr.mxu0 %v696
      %1336 = vmatpush2.msra.mxu0 %v695
      %1337 = vmatprep.subr.mxu0 %v694
      %1338 = vmatpush2.msra.mxu0 %v693
      %1339 = vmatprep.subr.mxu0 %v692
      %1340 = vmatpush2.msra.mxu0 %v691
      %1341 = vmatprep.subr.mxu0 %v690
      %1342 = vmatpush2.msra.mxu0 %v689
      %1343 = vmatprep.subr.mxu0 %v688
      %1344 = vmatpush2.msra.mxu0 %v687
      %1345 = vmatprep.mubr.f32.mxu0 %v236
      %1346 = vmatmul.mubr.f32.gmra.mxu0 %v235
      %v1347 = vpop.f32.mrf.mxu0
      %v1348 = vadd.f32 %v1265, %v1347
      %v1349 = vpop.f32.mrf.mxu0
      %v1350 = vadd.f32 %v1267, %v1349
      %1351 = vmatprep.mubr.f32.mxu0 %v252
      %1352 = vmatmul.mubr.f32.gmra.mxu0 %v251
      %v1353 = vpop.f32.mrf.mxu0
      %v1354 = vadd.f32 %v1271, %v1353
      %v1355 = vpop.f32.mrf.mxu0
      %v1356 = vadd.f32 %v1273, %v1355
      %1357 = vmatprep.mubr.f32.mxu0 %v268
      %1358 = vmatmul.mubr.f32.gmra.mxu0 %v267
      %v1359 = vpop.f32.mrf.mxu0
      %v1360 = vadd.f32 %v1277, %v1359
      %v1361 = vpop.f32.mrf.mxu0
      %v1362 = vadd.f32 %v1279, %v1361
      %1363 = vdwg.mxu0
      %1364 = vmatprep.subr.mxu0 %v750
      %1365 = vmatpush1.msra.mxu0 %v749
      %1366 = vmatprep.subr.mxu0 %v748
      %1367 = vmatpush1.msra.mxu0 %v747
      %1368 = vmatprep.subr.mxu0 %v746
      %1369 = vmatpush1.msra.mxu0 %v745
      %1370 = vmatprep.subr.mxu0 %v744
      %1371 = vmatpush1.msra.mxu0 %v743
      %1372 = vmatprep.subr.mxu0 %v742
      %1373 = vmatpush1.msra.mxu0 %v741
      %1374 = vmatprep.subr.mxu0 %v740
      %1375 = vmatpush1.msra.mxu0 %v739
      %1376 = vmatprep.subr.mxu0 %v738
      %1377 = vmatpush1.msra.mxu0 %v737
      %1378 = vmatprep.subr.mxu0 %v736
      %1379 = vmatpush1.msra.mxu0 %v735
      %1380 = vmatprep.subr.mxu0 %v734
      %1381 = vmatpush1.msra.mxu0 %v733
      %1382 = vmatprep.subr.mxu0 %v732
      %1383 = vmatpush1.msra.mxu0 %v731
      %1384 = vmatprep.subr.mxu0 %v730
      %1385 = vmatpush1.msra.mxu0 %v729
      %1386 = vmatprep.subr.mxu0 %v728
      %1387 = vmatpush1.msra.mxu0 %v727
      %1388 = vmatprep.subr.mxu0 %v726
      %1389 = vmatpush1.msra.mxu0 %v725
      %1390 = vmatprep.subr.mxu0 %v724
      %1391 = vmatpush1.msra.mxu0 %v723
      %1392 = vmatprep.subr.mxu0 %v722
      %1393 = vmatpush1.msra.mxu0 %v721
      %1394 = vmatprep.subr.mxu0 %v720
      %1395 = vmatpush1.msra.mxu0 %v719
      %1396 = vmatprep.subr.mxu0 %v782
      %1397 = vmatpush2.msra.mxu0 %v781
      %1398 = vmatprep.subr.mxu0 %v780
      %1399 = vmatpush2.msra.mxu0 %v779
      %1400 = vmatprep.subr.mxu0 %v778
      %1401 = vmatpush2.msra.mxu0 %v777
      %1402 = vmatprep.subr.mxu0 %v776
      %1403 = vmatpush2.msra.mxu0 %v775
      %1404 = vmatprep.subr.mxu0 %v774
      %1405 = vmatpush2.msra.mxu0 %v773
      %1406 = vmatprep.subr.mxu0 %v772
      %1407 = vmatpush2.msra.mxu0 %v771
      %1408 = vmatprep.subr.mxu0 %v770
      %1409 = vmatpush2.msra.mxu0 %v769
      %1410 = vmatprep.subr.mxu0 %v768
      %1411 = vmatpush2.msra.mxu0 %v767
      %1412 = vmatprep.subr.mxu0 %v766
      %1413 = vmatpush2.msra.mxu0 %v765
      %1414 = vmatprep.subr.mxu0 %v764
      %1415 = vmatpush2.msra.mxu0 %v763
      %1416 = vmatprep.subr.mxu0 %v762
      %1417 = vmatpush2.msra.mxu0 %v761
      %1418 = vmatprep.subr.mxu0 %v760
      %1419 = vmatpush2.msra.mxu0 %v759
      %1420 = vmatprep.subr.mxu0 %v758
      %1421 = vmatpush2.msra.mxu0 %v757
      %1422 = vmatprep.subr.mxu0 %v756
      %1423 = vmatpush2.msra.mxu0 %v755
      %1424 = vmatprep.subr.mxu0 %v754
      %1425 = vmatpush2.msra.mxu0 %v753
      %1426 = vmatprep.subr.mxu0 %v752
      %1427 = vmatpush2.msra.mxu0 %v751
      %1428 = vmatprep.mubr.f32.mxu0 %v238
      %1429 = vmatmul.mubr.f32.gmra.mxu0 %v237
      %v1430 = vpop.f32.mrf.mxu0
      %v1431 = vadd.f32 %v1348, %v1430
      %v1432 = vpop.f32.mrf.mxu0
      %v1433 = vadd.f32 %v1350, %v1432
      %1434 = vmatprep.mubr.f32.mxu0 %v254
      %1435 = vmatmul.mubr.f32.gmra.mxu0 %v253
      %v1436 = vpop.f32.mrf.mxu0
      %v1437 = vadd.f32 %v1354, %v1436
      %v1438 = vpop.f32.mrf.mxu0
      %v1439 = vadd.f32 %v1356, %v1438
      %1440 = vmatprep.mubr.f32.mxu0 %v270
      %1441 = vmatmul.mubr.f32.gmra.mxu0 %v269
      %v1442 = vpop.f32.mrf.mxu0
      %v1443 = vadd.f32 %v1360, %v1442
      %v1444 = vpop.f32.mrf.mxu0
      %v1445 = vadd.f32 %v1362, %v1444
      %1446 = vdwg.mxu0
      %v1447 = vadd.f32 %v1431, %v1433
      %1448 = vadd.xlane.f32.xlu0 %v1447
      %v1449 = vpop.xlane.xlu0 %1448
      %v1450 = vadd.f32 %v1437, %v1439
      %1451 = vadd.xlane.f32.xlu0 %v1450
      %v1452 = vpop.xlane.xlu0 %1451
      %vm1453 = vcmask 1043456
      %v1454 = vsel %vm1453, %v1443, 0.0
      %v1455 = vsel %vm1453, %v1445, 0.0
      %v1456 = vadd.f32 %v1454, %v1455
      %1457 = vadd.xlane.f32.xlu0 %v1456
      %v1458 = vpop.xlane.xlu0 %1457
      %v1459 = vrcp.pop 256.0
      %v1460 = vmul.f32 %v1449, %v1459
      %v1461 = vmul.f32 %v1452, %v1459
      %v1462 = vmul.f32 %v1458, %v1459
      %vm1463 = vcmask 7168
      %1464 = vst.msk [vmem:[%s212] sm:$0xff] %vm1463, %v1460
      %1465 = vst.msk [vmem:[%s212 + $0x8] sm:$0xff] %vm1463, %v1461
      %vm1466 = vcmask 3072
      %1467 = vst.msk [vmem:[%s212 + $0x10] sm:$0xf] %vm1466, %v1462
      %v1468 = vmax.f32 %v1431, 0.0
      %v1469 = vmax.f32 %v1433, 0.0
      %v1470 = vmax.f32 %v1437, 0.0
      %v1471 = vmax.f32 %v1439, 0.0
      %v1472 = vmax.f32 %v1443, 0.0
      %v1473 = vmax.f32 %v1445, 0.0
      %v1474 = vmax.f32 %v1468, %v1469
      %1475 = vmax.xlane.f32.xlu0 %v1474
      %v1476 = vpop.xlane.xlu0 %1475
      %v1477 = vmax.f32 %v1470, %v1471
      %1478 = vmax.xlane.f32.xlu0 %v1477
      %v1479 = vpop.xlane.xlu0 %1478
      %v1480 = vsel %vm1453, %v1472, -inf
      %v1481 = vsel %vm1453, %v1473, -inf
      %v1482 = vmax.f32 %v1480, %v1481
      %1483 = vmax.xlane.f32.xlu0 %v1482
      %v1484 = vpop.xlane.xlu0 %1483
      %v1485 = vadd.f32 %v1476, 1e-05
      %v1486 = vadd.f32 %v1479, 1e-05
      %v1487 = vadd.f32 %v1484, 1e-05
      %v1488 = vrcp.pop %v1485
      %v1489 = vmul.f32 %v1468, %v1488
      %v1490 = vmul.f32 %v1469, %v1488
      %v1491 = vrcp.pop %v1486
      %v1492 = vmul.f32 %v1470, %v1491
      %v1493 = vmul.f32 %v1471, %v1491
      %v1494 = vrcp.pop %v1487
      %v1495 = vmul.f32 %v1472, %v1494
      %v1496 = vmul.f32 %v1473, %v1494
      %1497 = vst [vmem:[%s222] sm:$0xff] %v1489
      %1498 = vst [vmem:[%s222 + $0x8] sm:$0xff] %v1490
      %1499 = vst [vmem:[%s222 + $0x10] sm:$0xff] %v1492
      %1500 = vst [vmem:[%s222 + $0x18] sm:$0xff] %v1493
      %1501 = vst [vmem:[%s222 + $0x20] sm:$0xf] %v1495
      %1502 = vst [vmem:[%s222 + $0x28] sm:$0xf] %v1496
      %1503 = vmatprep.subr.mxu0 %v302
      %1504 = vmatpush1.xpose.msra.mxu0 %v301
      %1505 = vmatprep.subr.mxu0 %v300
      %1506 = vmatpush1.xpose.msra.mxu0 %v299
      %1507 = vmatprep.subr.mxu0 %v298
      %1508 = vmatpush1.xpose.msra.mxu0 %v297
      %1509 = vmatprep.subr.mxu0 %v296
      %1510 = vmatpush1.xpose.msra.mxu0 %v295
      %1511 = vmatprep.subr.mxu0 %v294
      %1512 = vmatpush1.xpose.msra.mxu0 %v293
      %1513 = vmatprep.subr.mxu0 %v292
      %1514 = vmatpush1.xpose.msra.mxu0 %v291
      %1515 = vmatprep.subr.mxu0 %v290
      %1516 = vmatpush1.xpose.msra.mxu0 %v289
      %1517 = vmatprep.subr.mxu0 %v288
      %1518 = vmatpush1.xpose.msra.mxu0 %v287
      %1519 = vmatprep.subr.mxu0 %v286
      %1520 = vmatpush1.xpose.msra.mxu0 %v285
      %1521 = vmatprep.subr.mxu0 %v284
      %1522 = vmatpush1.xpose.msra.mxu0 %v283
      %1523 = vmatprep.subr.mxu0 %v282
      %1524 = vmatpush1.xpose.msra.mxu0 %v281
      %1525 = vmatprep.subr.mxu0 %v280
      %1526 = vmatpush1.xpose.msra.mxu0 %v279
      %1527 = vmatprep.subr.mxu0 %v278
      %1528 = vmatpush1.xpose.msra.mxu0 %v277
      %1529 = vmatprep.subr.mxu0 %v276
      %1530 = vmatpush1.xpose.msra.mxu0 %v275
      %1531 = vmatprep.subr.mxu0 %v274
      %1532 = vmatpush1.xpose.msra.mxu0 %v273
      %1533 = vmatprep.subr.mxu0 %v272
      %1534 = vmatpush1.xpose.msra.mxu0 %v271
      %1535 = vmatprep.subr.mxu0 %v334
      %1536 = vmatpush2.xpose.msra.mxu0 %v333
      %1537 = vmatprep.subr.mxu0 %v332
      %1538 = vmatpush2.xpose.msra.mxu0 %v331
      %1539 = vmatprep.subr.mxu0 %v330
      %1540 = vmatpush2.xpose.msra.mxu0 %v329
      %1541 = vmatprep.subr.mxu0 %v328
      %1542 = vmatpush2.xpose.msra.mxu0 %v327
      %1543 = vmatprep.subr.mxu0 %v326
      %1544 = vmatpush2.xpose.msra.mxu0 %v325
      %1545 = vmatprep.subr.mxu0 %v324
      %1546 = vmatpush2.xpose.msra.mxu0 %v323
      %1547 = vmatprep.subr.mxu0 %v322
      %1548 = vmatpush2.xpose.msra.mxu0 %v321
      %1549 = vmatprep.subr.mxu0 %v320
      %1550 = vmatpush2.xpose.msra.mxu0 %v319
      %1551 = vmatprep.subr.mxu0 %v318
      %1552 = vmatpush2.xpose.msra.mxu0 %v317
      %1553 = vmatprep.subr.mxu0 %v316
      %1554 = vmatpush2.xpose.msra.mxu0 %v315
      %1555 = vmatprep.subr.mxu0 %v314
      %1556 = vmatpush2.xpose.msra.mxu0 %v313
      %1557 = vmatprep.subr.mxu0 %v312
      %1558 = vmatpush2.xpose.msra.mxu0 %v311
      %1559 = vmatprep.subr.mxu0 %v310
      %1560 = vmatpush2.xpose.msra.mxu0 %v309
      %1561 = vmatprep.subr.mxu0 %v308
      %1562 = vmatpush2.xpose.msra.mxu0 %v307
      %1563 = vmatprep.subr.mxu0 %v306
      %1564 = vmatpush2.xpose.msra.mxu0 %v305
      %1565 = vmatprep.subr.mxu0 %v304
      %1566 = vmatpush2.xpose.msra.mxu0 %v303
      %1567 = vmatprep.mubr.f32.mxu0 %v1490
      %1568 = vmatmul.mubr.f32.gmra.mxu0 %v1489
      %v1569 = vpop.f32.mrf.mxu0
      %v1570 = vadd.f32 0.0, %v1569
      %v1571 = vpop.f32.mrf.mxu0
      %v1572 = vadd.f32 0.0, %v1571
      %1573 = vmatprep.mubr.f32.mxu0 %v1493
      %1574 = vmatmul.mubr.f32.gmra.mxu0 %v1492
      %v1575 = vpop.f32.mrf.mxu0
      %v1576 = vadd.f32 0.0, %v1575
      %v1577 = vpop.f32.mrf.mxu0
      %v1578 = vadd.f32 0.0, %v1577
      %1579 = vmatprep.mubr.f32.mxu0 %v1496
      %1580 = vmatmul.mubr.f32.gmra.mxu0 %v1495
      %v1581 = vpop.f32.mrf.mxu0
      %v1582 = vadd.f32 0.0, %v1581
      %v1583 = vpop.f32.mrf.mxu0
      %v1584 = vadd.f32 0.0, %v1583
      %1585 = vdwg.mxu0
      %1586 = vmatprep.subr.mxu0 %v366
      %1587 = vmatpush1.xpose.msra.mxu0 %v365
      %1588 = vmatprep.subr.mxu0 %v364
      %1589 = vmatpush1.xpose.msra.mxu0 %v363
      %1590 = vmatprep.subr.mxu0 %v362
      %1591 = vmatpush1.xpose.msra.mxu0 %v361
      %1592 = vmatprep.subr.mxu0 %v360
      %1593 = vmatpush1.xpose.msra.mxu0 %v359
      %1594 = vmatprep.subr.mxu0 %v358
      %1595 = vmatpush1.xpose.msra.mxu0 %v357
      %1596 = vmatprep.subr.mxu0 %v356
      %1597 = vmatpush1.xpose.msra.mxu0 %v355
      %1598 = vmatprep.subr.mxu0 %v354
      %1599 = vmatpush1.xpose.msra.mxu0 %v353
      %1600 = vmatprep.subr.mxu0 %v352
      %1601 = vmatpush1.xpose.msra.mxu0 %v351
      %1602 = vmatprep.subr.mxu0 %v350
      %1603 = vmatpush1.xpose.msra.mxu0 %v349
      %1604 = vmatprep.subr.mxu0 %v348
      %1605 = vmatpush1.xpose.msra.mxu0 %v347
      %1606 = vmatprep.subr.mxu0 %v346
      %1607 = vmatpush1.xpose.msra.mxu0 %v345
      %1608 = vmatprep.subr.mxu0 %v344
      %1609 = vmatpush1.xpose.msra.mxu0 %v343
      %1610 = vmatprep.subr.mxu0 %v342
      %1611 = vmatpush1.xpose.msra.mxu0 %v341
      %1612 = vmatprep.subr.mxu0 %v340
      %1613 = vmatpush1.xpose.msra.mxu0 %v339
      %1614 = vmatprep.subr.mxu0 %v338
      %1615 = vmatpush1.xpose.msra.mxu0 %v337
      %1616 = vmatprep.subr.mxu0 %v336
      %1617 = vmatpush1.xpose.msra.mxu0 %v335
      %1618 = vmatprep.subr.mxu0 %v398
      %1619 = vmatpush2.xpose.msra.mxu0 %v397
      %1620 = vmatprep.subr.mxu0 %v396
      %1621 = vmatpush2.xpose.msra.mxu0 %v395
      %1622 = vmatprep.subr.mxu0 %v394
      %1623 = vmatpush2.xpose.msra.mxu0 %v393
      %1624 = vmatprep.subr.mxu0 %v392
      %1625 = vmatpush2.xpose.msra.mxu0 %v391
      %1626 = vmatprep.subr.mxu0 %v390
      %1627 = vmatpush2.xpose.msra.mxu0 %v389
      %1628 = vmatprep.subr.mxu0 %v388
      %1629 = vmatpush2.xpose.msra.mxu0 %v387
      %1630 = vmatprep.subr.mxu0 %v386
      %1631 = vmatpush2.xpose.msra.mxu0 %v385
      %1632 = vmatprep.subr.mxu0 %v384
      %1633 = vmatpush2.xpose.msra.mxu0 %v383
      %1634 = vmatprep.subr.mxu0 %v382
      %1635 = vmatpush2.xpose.msra.mxu0 %v381
      %1636 = vmatprep.subr.mxu0 %v380
      %1637 = vmatpush2.xpose.msra.mxu0 %v379
      %1638 = vmatprep.subr.mxu0 %v378
      %1639 = vmatpush2.xpose.msra.mxu0 %v377
      %1640 = vmatprep.subr.mxu0 %v376
      %1641 = vmatpush2.xpose.msra.mxu0 %v375
      %1642 = vmatprep.subr.mxu0 %v374
      %1643 = vmatpush2.xpose.msra.mxu0 %v373
      %1644 = vmatprep.subr.mxu0 %v372
      %1645 = vmatpush2.xpose.msra.mxu0 %v371
      %1646 = vmatprep.subr.mxu0 %v370
      %1647 = vmatpush2.xpose.msra.mxu0 %v369
      %1648 = vmatprep.subr.mxu0 %v368
      %1649 = vmatpush2.xpose.msra.mxu0 %v367
      %1650 = vmatprep.mubr.f32.mxu0 %v1490
      %1651 = vmatmul.mubr.f32.gmra.mxu0 %v1489
      %v1652 = vpop.f32.mrf.mxu0
      %v1653 = vadd.f32 0.0, %v1652
      %v1654 = vpop.f32.mrf.mxu0
      %v1655 = vadd.f32 0.0, %v1654
      %1656 = vmatprep.mubr.f32.mxu0 %v1493
      %1657 = vmatmul.mubr.f32.gmra.mxu0 %v1492
      %v1658 = vpop.f32.mrf.mxu0
      %v1659 = vadd.f32 0.0, %v1658
      %v1660 = vpop.f32.mrf.mxu0
      %v1661 = vadd.f32 0.0, %v1660
      %1662 = vmatprep.mubr.f32.mxu0 %v1496
      %1663 = vmatmul.mubr.f32.gmra.mxu0 %v1495
      %v1664 = vpop.f32.mrf.mxu0
      %v1665 = vadd.f32 0.0, %v1664
      %v1666 = vpop.f32.mrf.mxu0
      %v1667 = vadd.f32 0.0, %v1666
      %1668 = vdwg.mxu0
      %1669 = vmatprep.subr.mxu0 %v430
      %1670 = vmatpush1.xpose.msra.mxu0 %v429
      %1671 = vmatprep.subr.mxu0 %v428
      %1672 = vmatpush1.xpose.msra.mxu0 %v427
      %1673 = vmatprep.subr.mxu0 %v426
      %1674 = vmatpush1.xpose.msra.mxu0 %v425
      %1675 = vmatprep.subr.mxu0 %v424
      %1676 = vmatpush1.xpose.msra.mxu0 %v423
      %1677 = vmatprep.subr.mxu0 %v422
      %1678 = vmatpush1.xpose.msra.mxu0 %v421
      %1679 = vmatprep.subr.mxu0 %v420
      %1680 = vmatpush1.xpose.msra.mxu0 %v419
      %1681 = vmatprep.subr.mxu0 %v418
      %1682 = vmatpush1.xpose.msra.mxu0 %v417
      %1683 = vmatprep.subr.mxu0 %v416
      %1684 = vmatpush1.xpose.msra.mxu0 %v415
      %1685 = vmatprep.subr.mxu0 %v414
      %1686 = vmatpush1.xpose.msra.mxu0 %v413
      %1687 = vmatprep.subr.mxu0 %v412
      %1688 = vmatpush1.xpose.msra.mxu0 %v411
      %1689 = vmatprep.subr.mxu0 %v410
      %1690 = vmatpush1.xpose.msra.mxu0 %v409
      %1691 = vmatprep.subr.mxu0 %v408
      %1692 = vmatpush1.xpose.msra.mxu0 %v407
      %1693 = vmatprep.subr.mxu0 %v406
      %1694 = vmatpush1.xpose.msra.mxu0 %v405
      %1695 = vmatprep.subr.mxu0 %v404
      %1696 = vmatpush1.xpose.msra.mxu0 %v403
      %1697 = vmatprep.subr.mxu0 %v402
      %1698 = vmatpush1.xpose.msra.mxu0 %v401
      %1699 = vmatprep.subr.mxu0 %v400
      %1700 = vmatpush1.xpose.msra.mxu0 %v399
      %1701 = vmatprep.subr.mxu0 %v462
      %1702 = vmatpush2.xpose.msra.mxu0 %v461
      %1703 = vmatprep.subr.mxu0 %v460
      %1704 = vmatpush2.xpose.msra.mxu0 %v459
      %1705 = vmatprep.subr.mxu0 %v458
      %1706 = vmatpush2.xpose.msra.mxu0 %v457
      %1707 = vmatprep.subr.mxu0 %v456
      %1708 = vmatpush2.xpose.msra.mxu0 %v455
      %1709 = vmatprep.subr.mxu0 %v454
      %1710 = vmatpush2.xpose.msra.mxu0 %v453
      %1711 = vmatprep.subr.mxu0 %v452
      %1712 = vmatpush2.xpose.msra.mxu0 %v451
      %1713 = vmatprep.subr.mxu0 %v450
      %1714 = vmatpush2.xpose.msra.mxu0 %v449
      %1715 = vmatprep.subr.mxu0 %v448
      %1716 = vmatpush2.xpose.msra.mxu0 %v447
      %1717 = vmatprep.subr.mxu0 %v446
      %1718 = vmatpush2.xpose.msra.mxu0 %v445
      %1719 = vmatprep.subr.mxu0 %v444
      %1720 = vmatpush2.xpose.msra.mxu0 %v443
      %1721 = vmatprep.subr.mxu0 %v442
      %1722 = vmatpush2.xpose.msra.mxu0 %v441
      %1723 = vmatprep.subr.mxu0 %v440
      %1724 = vmatpush2.xpose.msra.mxu0 %v439
      %1725 = vmatprep.subr.mxu0 %v438
      %1726 = vmatpush2.xpose.msra.mxu0 %v437
      %1727 = vmatprep.subr.mxu0 %v436
      %1728 = vmatpush2.xpose.msra.mxu0 %v435
      %1729 = vmatprep.subr.mxu0 %v434
      %1730 = vmatpush2.xpose.msra.mxu0 %v433
      %1731 = vmatprep.subr.mxu0 %v432
      %1732 = vmatpush2.xpose.msra.mxu0 %v431
      %1733 = vmatprep.mubr.f32.mxu0 %v1490
      %1734 = vmatmul.mubr.f32.gmra.mxu0 %v1489
      %v1735 = vpop.f32.mrf.mxu0
      %v1736 = vadd.f32 0.0, %v1735
      %v1737 = vpop.f32.mrf.mxu0
      %v1738 = vadd.f32 0.0, %v1737
      %1739 = vmatprep.mubr.f32.mxu0 %v1493
      %1740 = vmatmul.mubr.f32.gmra.mxu0 %v1492
      %v1741 = vpop.f32.mrf.mxu0
      %v1742 = vadd.f32 0.0, %v1741
      %v1743 = vpop.f32.mrf.mxu0
      %v1744 = vadd.f32 0.0, %v1743
      %1745 = vmatprep.mubr.f32.mxu0 %v1496
      %1746 = vmatmul.mubr.f32.gmra.mxu0 %v1495
      %v1747 = vpop.f32.mrf.mxu0
      %v1748 = vadd.f32 0.0, %v1747
      %v1749 = vpop.f32.mrf.mxu0
      %v1750 = vadd.f32 0.0, %v1749
      %1751 = vdwg.mxu0
      %1752 = vmatprep.subr.mxu0 %v494
      %1753 = vmatpush1.xpose.msra.mxu0 %v493
      %1754 = vmatprep.subr.mxu0 %v492
      %1755 = vmatpush1.xpose.msra.mxu0 %v491
      %1756 = vmatprep.subr.mxu0 %v490
      %1757 = vmatpush1.xpose.msra.mxu0 %v489
      %1758 = vmatprep.subr.mxu0 %v488
      %1759 = vmatpush1.xpose.msra.mxu0 %v487
      %1760 = vmatprep.subr.mxu0 %v486
      %1761 = vmatpush1.xpose.msra.mxu0 %v485
      %1762 = vmatprep.subr.mxu0 %v484
      %1763 = vmatpush1.xpose.msra.mxu0 %v483
      %1764 = vmatprep.subr.mxu0 %v482
      %1765 = vmatpush1.xpose.msra.mxu0 %v481
      %1766 = vmatprep.subr.mxu0 %v480
      %1767 = vmatpush1.xpose.msra.mxu0 %v479
      %1768 = vmatprep.subr.mxu0 %v478
      %1769 = vmatpush1.xpose.msra.mxu0 %v477
      %1770 = vmatprep.subr.mxu0 %v476
      %1771 = vmatpush1.xpose.msra.mxu0 %v475
      %1772 = vmatprep.subr.mxu0 %v474
      %1773 = vmatpush1.xpose.msra.mxu0 %v473
      %1774 = vmatprep.subr.mxu0 %v472
      %1775 = vmatpush1.xpose.msra.mxu0 %v471
      %1776 = vmatprep.subr.mxu0 %v470
      %1777 = vmatpush1.xpose.msra.mxu0 %v469
      %1778 = vmatprep.subr.mxu0 %v468
      %1779 = vmatpush1.xpose.msra.mxu0 %v467
      %1780 = vmatprep.subr.mxu0 %v466
      %1781 = vmatpush1.xpose.msra.mxu0 %v465
      %1782 = vmatprep.subr.mxu0 %v464
      %1783 = vmatpush1.xpose.msra.mxu0 %v463
      %1784 = vmatprep.subr.mxu0 %v526
      %1785 = vmatpush2.xpose.msra.mxu0 %v525
      %1786 = vmatprep.subr.mxu0 %v524
      %1787 = vmatpush2.xpose.msra.mxu0 %v523
      %1788 = vmatprep.subr.mxu0 %v522
      %1789 = vmatpush2.xpose.msra.mxu0 %v521
      %1790 = vmatprep.subr.mxu0 %v520
      %1791 = vmatpush2.xpose.msra.mxu0 %v519
      %1792 = vmatprep.subr.mxu0 %v518
      %1793 = vmatpush2.xpose.msra.mxu0 %v517
      %1794 = vmatprep.subr.mxu0 %v516
      %1795 = vmatpush2.xpose.msra.mxu0 %v515
      %1796 = vmatprep.subr.mxu0 %v514
      %1797 = vmatpush2.xpose.msra.mxu0 %v513
      %1798 = vmatprep.subr.mxu0 %v512
      %1799 = vmatpush2.xpose.msra.mxu0 %v511
      %1800 = vmatprep.subr.mxu0 %v510
      %1801 = vmatpush2.xpose.msra.mxu0 %v509
      %1802 = vmatprep.subr.mxu0 %v508
      %1803 = vmatpush2.xpose.msra.mxu0 %v507
      %1804 = vmatprep.subr.mxu0 %v506
      %1805 = vmatpush2.xpose.msra.mxu0 %v505
      %1806 = vmatprep.subr.mxu0 %v504
      %1807 = vmatpush2.xpose.msra.mxu0 %v503
      %1808 = vmatprep.subr.mxu0 %v502
      %1809 = vmatpush2.xpose.msra.mxu0 %v501
      %1810 = vmatprep.subr.mxu0 %v500
      %1811 = vmatpush2.xpose.msra.mxu0 %v499
      %1812 = vmatprep.subr.mxu0 %v498
      %1813 = vmatpush2.xpose.msra.mxu0 %v497
      %1814 = vmatprep.subr.mxu0 %v496
      %1815 = vmatpush2.xpose.msra.mxu0 %v495
      %1816 = vmatprep.mubr.f32.mxu0 %v1490
      %1817 = vmatmul.mubr.f32.gmra.mxu0 %v1489
      %v1818 = vpop.f32.mrf.mxu0
      %v1819 = vadd.f32 0.0, %v1818
      %v1820 = vpop.f32.mrf.mxu0
      %v1821 = vadd.f32 0.0, %v1820
      %1822 = vmatprep.mubr.f32.mxu0 %v1493
      %1823 = vmatmul.mubr.f32.gmra.mxu0 %v1492
      %v1824 = vpop.f32.mrf.mxu0
      %v1825 = vadd.f32 0.0, %v1824
      %v1826 = vpop.f32.mrf.mxu0
      %v1827 = vadd.f32 0.0, %v1826
      %1828 = vmatprep.mubr.f32.mxu0 %v1496
      %1829 = vmatmul.mubr.f32.gmra.mxu0 %v1495
      %v1830 = vpop.f32.mrf.mxu0
      %v1831 = vadd.f32 0.0, %v1830
      %v1832 = vpop.f32.mrf.mxu0
      %v1833 = vadd.f32 0.0, %v1832
      %1834 = vdwg.mxu0
      %1835 = vmatprep.subr.mxu0 %v558
      %1836 = vmatpush1.xpose.msra.mxu0 %v557
      %1837 = vmatprep.subr.mxu0 %v556
      %1838 = vmatpush1.xpose.msra.mxu0 %v555
      %1839 = vmatprep.subr.mxu0 %v554
      %1840 = vmatpush1.xpose.msra.mxu0 %v553
      %1841 = vmatprep.subr.mxu0 %v552
      %1842 = vmatpush1.xpose.msra.mxu0 %v551
      %1843 = vmatprep.subr.mxu0 %v550
      %1844 = vmatpush1.xpose.msra.mxu0 %v549
      %1845 = vmatprep.subr.mxu0 %v548
      %1846 = vmatpush1.xpose.msra.mxu0 %v547
      %1847 = vmatprep.subr.mxu0 %v546
      %1848 = vmatpush1.xpose.msra.mxu0 %v545
      %1849 = vmatprep.subr.mxu0 %v544
      %1850 = vmatpush1.xpose.msra.mxu0 %v543
      %1851 = vmatprep.subr.mxu0 %v542
      %1852 = vmatpush1.xpose.msra.mxu0 %v541
      %1853 = vmatprep.subr.mxu0 %v540
      %1854 = vmatpush1.xpose.msra.mxu0 %v539
      %1855 = vmatprep.subr.mxu0 %v538
      %1856 = vmatpush1.xpose.msra.mxu0 %v537
      %1857 = vmatprep.subr.mxu0 %v536
      %1858 = vmatpush1.xpose.msra.mxu0 %v535
      %1859 = vmatprep.subr.mxu0 %v534
      %1860 = vmatpush1.xpose.msra.mxu0 %v533
      %1861 = vmatprep.subr.mxu0 %v532
      %1862 = vmatpush1.xpose.msra.mxu0 %v531
      %1863 = vmatprep.subr.mxu0 %v530
      %1864 = vmatpush1.xpose.msra.mxu0 %v529
      %1865 = vmatprep.subr.mxu0 %v528
      %1866 = vmatpush1.xpose.msra.mxu0 %v527
      %1867 = vmatprep.subr.mxu0 %v590
      %1868 = vmatpush2.xpose.msra.mxu0 %v589
      %1869 = vmatprep.subr.mxu0 %v588
      %1870 = vmatpush2.xpose.msra.mxu0 %v587
      %1871 = vmatprep.subr.mxu0 %v586
      %1872 = vmatpush2.xpose.msra.mxu0 %v585
      %1873 = vmatprep.subr.mxu0 %v584
      %1874 = vmatpush2.xpose.msra.mxu0 %v583
      %1875 = vmatprep.subr.mxu0 %v582
      %1876 = vmatpush2.xpose.msra.mxu0 %v581
      %1877 = vmatprep.subr.mxu0 %v580
      %1878 = vmatpush2.xpose.msra.mxu0 %v579
      %1879 = vmatprep.subr.mxu0 %v578
      %1880 = vmatpush2.xpose.msra.mxu0 %v577
      %1881 = vmatprep.subr.mxu0 %v576
      %1882 = vmatpush2.xpose.msra.mxu0 %v575
      %1883 = vmatprep.subr.mxu0 %v574
      %1884 = vmatpush2.xpose.msra.mxu0 %v573
      %1885 = vmatprep.subr.mxu0 %v572
      %1886 = vmatpush2.xpose.msra.mxu0 %v571
      %1887 = vmatprep.subr.mxu0 %v570
      %1888 = vmatpush2.xpose.msra.mxu0 %v569
      %1889 = vmatprep.subr.mxu0 %v568
      %1890 = vmatpush2.xpose.msra.mxu0 %v567
      %1891 = vmatprep.subr.mxu0 %v566
      %1892 = vmatpush2.xpose.msra.mxu0 %v565
      %1893 = vmatprep.subr.mxu0 %v564
      %1894 = vmatpush2.xpose.msra.mxu0 %v563
      %1895 = vmatprep.subr.mxu0 %v562
      %1896 = vmatpush2.xpose.msra.mxu0 %v561
      %1897 = vmatprep.subr.mxu0 %v560
      %1898 = vmatpush2.xpose.msra.mxu0 %v559
      %1899 = vmatprep.mubr.f32.mxu0 %v1490
      %1900 = vmatmul.mubr.f32.gmra.mxu0 %v1489
      %v1901 = vpop.f32.mrf.mxu0
      %v1902 = vadd.f32 0.0, %v1901
      %v1903 = vpop.f32.mrf.mxu0
      %v1904 = vadd.f32 0.0, %v1903
      %1905 = vmatprep.mubr.f32.mxu0 %v1493
      %1906 = vmatmul.mubr.f32.gmra.mxu0 %v1492
      %v1907 = vpop.f32.mrf.mxu0
      %v1908 = vadd.f32 0.0, %v1907
      %v1909 = vpop.f32.mrf.mxu0
      %v1910 = vadd.f32 0.0, %v1909
      %1911 = vmatprep.mubr.f32.mxu0 %v1496
      %1912 = vmatmul.mubr.f32.gmra.mxu0 %v1495
      %v1913 = vpop.f32.mrf.mxu0
      %v1914 = vadd.f32 0.0, %v1913
      %v1915 = vpop.f32.mrf.mxu0
      %v1916 = vadd.f32 0.0, %v1915
      %1917 = vdwg.mxu0
      %1918 = vmatprep.subr.mxu0 %v622
      %1919 = vmatpush1.xpose.msra.mxu0 %v621
      %1920 = vmatprep.subr.mxu0 %v620
      %1921 = vmatpush1.xpose.msra.mxu0 %v619
      %1922 = vmatprep.subr.mxu0 %v618
      %1923 = vmatpush1.xpose.msra.mxu0 %v617
      %1924 = vmatprep.subr.mxu0 %v616
      %1925 = vmatpush1.xpose.msra.mxu0 %v615
      %1926 = vmatprep.subr.mxu0 %v614
      %1927 = vmatpush1.xpose.msra.mxu0 %v613
      %1928 = vmatprep.subr.mxu0 %v612
      %1929 = vmatpush1.xpose.msra.mxu0 %v611
      %1930 = vmatprep.subr.mxu0 %v610
      %1931 = vmatpush1.xpose.msra.mxu0 %v609
      %1932 = vmatprep.subr.mxu0 %v608
      %1933 = vmatpush1.xpose.msra.mxu0 %v607
      %1934 = vmatprep.subr.mxu0 %v606
      %1935 = vmatpush1.xpose.msra.mxu0 %v605
      %1936 = vmatprep.subr.mxu0 %v604
      %1937 = vmatpush1.xpose.msra.mxu0 %v603
      %1938 = vmatprep.subr.mxu0 %v602
      %1939 = vmatpush1.xpose.msra.mxu0 %v601
      %1940 = vmatprep.subr.mxu0 %v600
      %1941 = vmatpush1.xpose.msra.mxu0 %v599
      %1942 = vmatprep.subr.mxu0 %v598
      %1943 = vmatpush1.xpose.msra.mxu0 %v597
      %1944 = vmatprep.subr.mxu0 %v596
      %1945 = vmatpush1.xpose.msra.mxu0 %v595
      %1946 = vmatprep.subr.mxu0 %v594
      %1947 = vmatpush1.xpose.msra.mxu0 %v593
      %1948 = vmatprep.subr.mxu0 %v592
      %1949 = vmatpush1.xpose.msra.mxu0 %v591
      %1950 = vmatprep.subr.mxu0 %v654
      %1951 = vmatpush2.xpose.msra.mxu0 %v653
      %1952 = vmatprep.subr.mxu0 %v652
      %1953 = vmatpush2.xpose.msra.mxu0 %v651
      %1954 = vmatprep.subr.mxu0 %v650
      %1955 = vmatpush2.xpose.msra.mxu0 %v649
      %1956 = vmatprep.subr.mxu0 %v648
      %1957 = vmatpush2.xpose.msra.mxu0 %v647
      %1958 = vmatprep.subr.mxu0 %v646
      %1959 = vmatpush2.xpose.msra.mxu0 %v645
      %1960 = vmatprep.subr.mxu0 %v644
      %1961 = vmatpush2.xpose.msra.mxu0 %v643
      %1962 = vmatprep.subr.mxu0 %v642
      %1963 = vmatpush2.xpose.msra.mxu0 %v641
      %1964 = vmatprep.subr.mxu0 %v640
      %1965 = vmatpush2.xpose.msra.mxu0 %v639
      %1966 = vmatprep.subr.mxu0 %v638
      %1967 = vmatpush2.xpose.msra.mxu0 %v637
      %1968 = vmatprep.subr.mxu0 %v636
      %1969 = vmatpush2.xpose.msra.mxu0 %v635
      %1970 = vmatprep.subr.mxu0 %v634
      %1971 = vmatpush2.xpose.msra.mxu0 %v633
      %1972 = vmatprep.subr.mxu0 %v632
      %1973 = vmatpush2.xpose.msra.mxu0 %v631
      %1974 = vmatprep.subr.mxu0 %v630
      %1975 = vmatpush2.xpose.msra.mxu0 %v629
      %1976 = vmatprep.subr.mxu0 %v628
      %1977 = vmatpush2.xpose.msra.mxu0 %v627
      %1978 = vmatprep.subr.mxu0 %v626
      %1979 = vmatpush2.xpose.msra.mxu0 %v625
      %1980 = vmatprep.subr.mxu0 %v624
      %1981 = vmatpush2.xpose.msra.mxu0 %v623
      %1982 = vmatprep.mubr.f32.mxu0 %v1490
      %1983 = vmatmul.mubr.f32.gmra.mxu0 %v1489
      %v1984 = vpop.f32.mrf.mxu0
      %v1985 = vadd.f32 0.0, %v1984
      %v1986 = vpop.f32.mrf.mxu0
      %v1987 = vadd.f32 0.0, %v1986
      %1988 = vmatprep.mubr.f32.mxu0 %v1493
      %1989 = vmatmul.mubr.f32.gmra.mxu0 %v1492
      %v1990 = vpop.f32.mrf.mxu0
      %v1991 = vadd.f32 0.0, %v1990
      %v1992 = vpop.f32.mrf.mxu0
      %v1993 = vadd.f32 0.0, %v1992
      %1994 = vmatprep.mubr.f32.mxu0 %v1496
      %1995 = vmatmul.mubr.f32.gmra.mxu0 %v1495
      %v1996 = vpop.f32.mrf.mxu0
      %v1997 = vadd.f32 0.0, %v1996
      %v1998 = vpop.f32.mrf.mxu0
      %v1999 = vadd.f32 0.0, %v1998
      %2000 = vdwg.mxu0
      %2001 = vmatprep.subr.mxu0 %v686
      %2002 = vmatpush1.xpose.msra.mxu0 %v685
      %2003 = vmatprep.subr.mxu0 %v684
      %2004 = vmatpush1.xpose.msra.mxu0 %v683
      %2005 = vmatprep.subr.mxu0 %v682
      %2006 = vmatpush1.xpose.msra.mxu0 %v681
      %2007 = vmatprep.subr.mxu0 %v680
      %2008 = vmatpush1.xpose.msra.mxu0 %v679
      %2009 = vmatprep.subr.mxu0 %v678
      %2010 = vmatpush1.xpose.msra.mxu0 %v677
      %2011 = vmatprep.subr.mxu0 %v676
      %2012 = vmatpush1.xpose.msra.mxu0 %v675
      %2013 = vmatprep.subr.mxu0 %v674
      %2014 = vmatpush1.xpose.msra.mxu0 %v673
      %2015 = vmatprep.subr.mxu0 %v672
      %2016 = vmatpush1.xpose.msra.mxu0 %v671
      %2017 = vmatprep.subr.mxu0 %v670
      %2018 = vmatpush1.xpose.msra.mxu0 %v669
      %2019 = vmatprep.subr.mxu0 %v668
      %2020 = vmatpush1.xpose.msra.mxu0 %v667
      %2021 = vmatprep.subr.mxu0 %v666
      %2022 = vmatpush1.xpose.msra.mxu0 %v665
      %2023 = vmatprep.subr.mxu0 %v664
      %2024 = vmatpush1.xpose.msra.mxu0 %v663
      %2025 = vmatprep.subr.mxu0 %v662
      %2026 = vmatpush1.xpose.msra.mxu0 %v661
      %2027 = vmatprep.subr.mxu0 %v660
      %2028 = vmatpush1.xpose.msra.mxu0 %v659
      %2029 = vmatprep.subr.mxu0 %v658
      %2030 = vmatpush1.xpose.msra.mxu0 %v657
      %2031 = vmatprep.subr.mxu0 %v656
      %2032 = vmatpush1.xpose.msra.mxu0 %v655
      %2033 = vmatprep.subr.mxu0 %v718
      %2034 = vmatpush2.xpose.msra.mxu0 %v717
      %2035 = vmatprep.subr.mxu0 %v716
      %2036 = vmatpush2.xpose.msra.mxu0 %v715
      %2037 = vmatprep.subr.mxu0 %v714
      %2038 = vmatpush2.xpose.msra.mxu0 %v713
      %2039 = vmatprep.subr.mxu0 %v712
      %2040 = vmatpush2.xpose.msra.mxu0 %v711
      %2041 = vmatprep.subr.mxu0 %v710
      %2042 = vmatpush2.xpose.msra.mxu0 %v709
      %2043 = vmatprep.subr.mxu0 %v708
      %2044 = vmatpush2.xpose.msra.mxu0 %v707
      %2045 = vmatprep.subr.mxu0 %v706
      %2046 = vmatpush2.xpose.msra.mxu0 %v705
      %2047 = vmatprep.subr.mxu0 %v704
      %2048 = vmatpush2.xpose.msra.mxu0 %v703
      %2049 = vmatprep.subr.mxu0 %v702
      %2050 = vmatpush2.xpose.msra.mxu0 %v701
      %2051 = vmatprep.subr.mxu0 %v700
      %2052 = vmatpush2.xpose.msra.mxu0 %v699
      %2053 = vmatprep.subr.mxu0 %v698
      %2054 = vmatpush2.xpose.msra.mxu0 %v697
      %2055 = vmatprep.subr.mxu0 %v696
      %2056 = vmatpush2.xpose.msra.mxu0 %v695
      %2057 = vmatprep.subr.mxu0 %v694
      %2058 = vmatpush2.xpose.msra.mxu0 %v693
      %2059 = vmatprep.subr.mxu0 %v692
      %2060 = vmatpush2.xpose.msra.mxu0 %v691
      %2061 = vmatprep.subr.mxu0 %v690
      %2062 = vmatpush2.xpose.msra.mxu0 %v689
      %2063 = vmatprep.subr.mxu0 %v688
      %2064 = vmatpush2.xpose.msra.mxu0 %v687
      %2065 = vmatprep.mubr.f32.mxu0 %v1490
      %2066 = vmatmul.mubr.f32.gmra.mxu0 %v1489
      %v2067 = vpop.f32.mrf.mxu0
      %v2068 = vadd.f32 0.0, %v2067
      %v2069 = vpop.f32.mrf.mxu0
      %v2070 = vadd.f32 0.0, %v2069
      %2071 = vmatprep.mubr.f32.mxu0 %v1493
      %2072 = vmatmul.mubr.f32.gmra.mxu0 %v1492
      %v2073 = vpop.f32.mrf.mxu0
      %v2074 = vadd.f32 0.0, %v2073
      %v2075 = vpop.f32.mrf.mxu0
      %v2076 = vadd.f32 0.0, %v2075
      %2077 = vmatprep.mubr.f32.mxu0 %v1496
      %2078 = vmatmul.mubr.f32.gmra.mxu0 %v1495
      %v2079 = vpop.f32.mrf.mxu0
      %v2080 = vadd.f32 0.0, %v2079
      %v2081 = vpop.f32.mrf.mxu0
      %v2082 = vadd.f32 0.0, %v2081
      %2083 = vdwg.mxu0
      %2084 = vmatprep.subr.mxu0 %v750
      %2085 = vmatpush1.xpose.msra.mxu0 %v749
      %2086 = vmatprep.subr.mxu0 %v748
      %2087 = vmatpush1.xpose.msra.mxu0 %v747
      %2088 = vmatprep.subr.mxu0 %v746
      %2089 = vmatpush1.xpose.msra.mxu0 %v745
      %2090 = vmatprep.subr.mxu0 %v744
      %2091 = vmatpush1.xpose.msra.mxu0 %v743
      %2092 = vmatprep.subr.mxu0 %v742
      %2093 = vmatpush1.xpose.msra.mxu0 %v741
      %2094 = vmatprep.subr.mxu0 %v740
      %2095 = vmatpush1.xpose.msra.mxu0 %v739
      %2096 = vmatprep.subr.mxu0 %v738
      %2097 = vmatpush1.xpose.msra.mxu0 %v737
      %2098 = vmatprep.subr.mxu0 %v736
      %2099 = vmatpush1.xpose.msra.mxu0 %v735
      %2100 = vmatprep.subr.mxu0 %v734
      %2101 = vmatpush1.xpose.msra.mxu0 %v733
      %2102 = vmatprep.subr.mxu0 %v732
      %2103 = vmatpush1.xpose.msra.mxu0 %v731
      %2104 = vmatprep.subr.mxu0 %v730
      %2105 = vmatpush1.xpose.msra.mxu0 %v729
      %2106 = vmatprep.subr.mxu0 %v728
      %2107 = vmatpush1.xpose.msra.mxu0 %v727
      %2108 = vmatprep.subr.mxu0 %v726
      %2109 = vmatpush1.xpose.msra.mxu0 %v725
      %2110 = vmatprep.subr.mxu0 %v724
      %2111 = vmatpush1.xpose.msra.mxu0 %v723
      %2112 = vmatprep.subr.mxu0 %v722
      %2113 = vmatpush1.xpose.msra.mxu0 %v721
      %2114 = vmatprep.subr.mxu0 %v720
      %2115 = vmatpush1.xpose.msra.mxu0 %v719
      %2116 = vmatprep.subr.mxu0 %v782
      %2117 = vmatpush2.xpose.msra.mxu0 %v781
      %2118 = vmatprep.subr.mxu0 %v780
      %2119 = vmatpush2.xpose.msra.mxu0 %v779
      %2120 = vmatprep.subr.mxu0 %v778
      %2121 = vmatpush2.xpose.msra.mxu0 %v777
      %2122 = vmatprep.subr.mxu0 %v776
      %2123 = vmatpush2.xpose.msra.mxu0 %v775
      %2124 = vmatprep.subr.mxu0 %v774
      %2125 = vmatpush2.xpose.msra.mxu0 %v773
      %2126 = vmatprep.subr.mxu0 %v772
      %2127 = vmatpush2.xpose.msra.mxu0 %v771
      %2128 = vmatprep.subr.mxu0 %v770
      %2129 = vmatpush2.xpose.msra.mxu0 %v769
      %2130 = vmatprep.subr.mxu0 %v768
      %2131 = vmatpush2.xpose.msra.mxu0 %v767
      %2132 = vmatprep.subr.mxu0 %v766
      %2133 = vmatpush2.xpose.msra.mxu0 %v765
      %2134 = vmatprep.subr.mxu0 %v764
      %2135 = vmatpush2.xpose.msra.mxu0 %v763
      %2136 = vmatprep.subr.mxu0 %v762
      %2137 = vmatpush2.xpose.msra.mxu0 %v761
      %2138 = vmatprep.subr.mxu0 %v760
      %2139 = vmatpush2.xpose.msra.mxu0 %v759
      %2140 = vmatprep.subr.mxu0 %v758
      %2141 = vmatpush2.xpose.msra.mxu0 %v757
      %2142 = vmatprep.subr.mxu0 %v756
      %2143 = vmatpush2.xpose.msra.mxu0 %v755
      %2144 = vmatprep.subr.mxu0 %v754
      %2145 = vmatpush2.xpose.msra.mxu0 %v753
      %2146 = vmatprep.subr.mxu0 %v752
      %2147 = vmatpush2.xpose.msra.mxu0 %v751
      %2148 = vmatprep.mubr.f32.mxu0 %v1490
      %2149 = vmatmul.mubr.f32.gmra.mxu0 %v1489
      %v2150 = vpop.f32.mrf.mxu0
      %v2151 = vadd.f32 0.0, %v2150
      %v2152 = vpop.f32.mrf.mxu0
      %v2153 = vadd.f32 0.0, %v2152
      %2154 = vmatprep.mubr.f32.mxu0 %v1493
      %2155 = vmatmul.mubr.f32.gmra.mxu0 %v1492
      %v2156 = vpop.f32.mrf.mxu0
      %v2157 = vadd.f32 0.0, %v2156
      %v2158 = vpop.f32.mrf.mxu0
      %v2159 = vadd.f32 0.0, %v2158
      %2160 = vmatprep.mubr.f32.mxu0 %v1496
      %2161 = vmatmul.mubr.f32.gmra.mxu0 %v1495
      %v2162 = vpop.f32.mrf.mxu0
      %v2163 = vadd.f32 0.0, %v2162
      %v2164 = vpop.f32.mrf.mxu0
      %v2165 = vadd.f32 0.0, %v2164
      %2166 = vdwg.mxu0
      %v2167 = vmul.f32 %v1570, 0.00390625
      %v2168 = vmul.f32 %v1572, 0.00390625
      %v2169 = vmul.f32 %v1653, 0.00390625
      %v2170 = vmul.f32 %v1655, 0.00390625
      %v2171 = vmul.f32 %v1736, 0.00390625
      %v2172 = vmul.f32 %v1738, 0.00390625
      %v2173 = vmul.f32 %v1819, 0.00390625
      %v2174 = vmul.f32 %v1821, 0.00390625
      %v2175 = vmul.f32 %v1902, 0.00390625
      %v2176 = vmul.f32 %v1904, 0.00390625
      %v2177 = vmul.f32 %v1985, 0.00390625
      %v2178 = vmul.f32 %v1987, 0.00390625
      %v2179 = vmul.f32 %v2068, 0.00390625
      %v2180 = vmul.f32 %v2070, 0.00390625
      %v2181 = vmul.f32 %v2151, 0.00390625
      %v2182 = vmul.f32 %v2153, 0.00390625
      %v2183 = vmul.f32 %v1576, 0.00390625
      %v2184 = vmul.f32 %v1578, 0.00390625
      %v2185 = vmul.f32 %v1659, 0.00390625
      %v2186 = vmul.f32 %v1661, 0.00390625
      %v2187 = vmul.f32 %v1742, 0.00390625
      %v2188 = vmul.f32 %v1744, 0.00390625
      %v2189 = vmul.f32 %v1825, 0.00390625
      %v2190 = vmul.f32 %v1827, 0.00390625
      %v2191 = vmul.f32 %v1908, 0.00390625
      %v2192 = vmul.f32 %v1910, 0.00390625
      %v2193 = vmul.f32 %v1991, 0.00390625
      %v2194 = vmul.f32 %v1993, 0.00390625
      %v2195 = vmul.f32 %v2074, 0.00390625
      %v2196 = vmul.f32 %v2076, 0.00390625
      %v2197 = vmul.f32 %v2157, 0.00390625
      %v2198 = vmul.f32 %v2159, 0.00390625
      %v2199 = vmul.f32 %v1582, 0.00390625
      %v2200 = vmul.f32 %v1584, 0.00390625
      %v2201 = vmul.f32 %v1665, 0.00390625
      %v2202 = vmul.f32 %v1667, 0.00390625
      %v2203 = vmul.f32 %v1748, 0.00390625
      %v2204 = vmul.f32 %v1750, 0.00390625
      %v2205 = vmul.f32 %v1831, 0.00390625
      %v2206 = vmul.f32 %v1833, 0.00390625
      %v2207 = vmul.f32 %v1914, 0.00390625
      %v2208 = vmul.f32 %v1916, 0.00390625
      %v2209 = vmul.f32 %v1997, 0.00390625
      %v2210 = vmul.f32 %v1999, 0.00390625
      %v2211 = vmul.f32 %v2080, 0.00390625
      %v2212 = vmul.f32 %v2082, 0.00390625
      %v2213 = vmul.f32 %v2163, 0.00390625
      %v2214 = vmul.f32 %v2165, 0.00390625
      %2215 = vst [vmem:[%s217] sm:$0xff] %v2167
      %2216 = vst [vmem:[%s217 + $0x8] sm:$0xff] %v2168
      %2217 = vst [vmem:[%s217 + $0x10] sm:$0xff] %v2169
      %2218 = vst [vmem:[%s217 + $0x18] sm:$0xff] %v2170
      %2219 = vst [vmem:[%s217 + $0x20] sm:$0xff] %v2171
      %2220 = vst [vmem:[%s217 + $0x28] sm:$0xff] %v2172
      %2221 = vst [vmem:[%s217 + $0x30] sm:$0xff] %v2173
      %2222 = vst [vmem:[%s217 + $0x38] sm:$0xff] %v2174
      %2223 = vst [vmem:[%s217 + $0x40] sm:$0xff] %v2175
      %2224 = vst [vmem:[%s217 + $0x48] sm:$0xff] %v2176
      %2225 = vst [vmem:[%s217 + $0x50] sm:$0xff] %v2177
      %2226 = vst [vmem:[%s217 + $0x58] sm:$0xff] %v2178
      %2227 = vst [vmem:[%s217 + $0x60] sm:$0xff] %v2179
      %2228 = vst [vmem:[%s217 + $0x68] sm:$0xff] %v2180
      %2229 = vst [vmem:[%s217 + $0x70] sm:$0xff] %v2181
      %2230 = vst [vmem:[%s217 + $0x78] sm:$0xff] %v2182
      %2231 = vst [vmem:[%s217 + $0x80] sm:$0xff] %v2183
      %2232 = vst [vmem:[%s217 + $0x88] sm:$0xff] %v2184
      %2233 = vst [vmem:[%s217 + $0x90] sm:$0xff] %v2185
      %2234 = vst [vmem:[%s217 + $0x98] sm:$0xff] %v2186
      %2235 = vst [vmem:[%s217 + $0xa0] sm:$0xff] %v2187
      %2236 = vst [vmem:[%s217 + $0xa8] sm:$0xff] %v2188
      %2237 = vst [vmem:[%s217 + $0xb0] sm:$0xff] %v2189
      %2238 = vst [vmem:[%s217 + $0xb8] sm:$0xff] %v2190
      %2239 = vst [vmem:[%s217 + $0xc0] sm:$0xff] %v2191
      %2240 = vst [vmem:[%s217 + $0xc8] sm:$0xff] %v2192
      %2241 = vst [vmem:[%s217 + $0xd0] sm:$0xff] %v2193
      %2242 = vst [vmem:[%s217 + $0xd8] sm:$0xff] %v2194
      %2243 = vst [vmem:[%s217 + $0xe0] sm:$0xff] %v2195
      %2244 = vst [vmem:[%s217 + $0xe8] sm:$0xff] %v2196
      %2245 = vst [vmem:[%s217 + $0xf0] sm:$0xff] %v2197
      %2246 = vst [vmem:[%s217 + $0xf8] sm:$0xff] %v2198
      %2247 = vst [vmem:[%s217 + $0x100] sm:$0xf] %v2199
      %2248 = vst [vmem:[%s217 + $0x108] sm:$0xf] %v2200
      %2249 = vst [vmem:[%s217 + $0x110] sm:$0xf] %v2201
      %2250 = vst [vmem:[%s217 + $0x118] sm:$0xf] %v2202
      %2251 = vst [vmem:[%s217 + $0x120] sm:$0xf] %v2203
      %2252 = vst [vmem:[%s217 + $0x128] sm:$0xf] %v2204
      %2253 = vst [vmem:[%s217 + $0x130] sm:$0xf] %v2205
      %2254 = vst [vmem:[%s217 + $0x138] sm:$0xf] %v2206
      %2255 = vst [vmem:[%s217 + $0x140] sm:$0xf] %v2207
      %2256 = vst [vmem:[%s217 + $0x148] sm:$0xf] %v2208
      %2257 = vst [vmem:[%s217 + $0x150] sm:$0xf] %v2209
      %2258 = vst [vmem:[%s217 + $0x158] sm:$0xf] %v2210
      %2259 = vst [vmem:[%s217 + $0x160] sm:$0xf] %v2211
      %2260 = vst [vmem:[%s217 + $0x168] sm:$0xf] %v2212
      %2261 = vst [vmem:[%s217 + $0x170] sm:$0xf] %v2213
      %2262 = vst [vmem:[%s217 + $0x178] sm:$0xf] %v2214
      %p2263 = scmp.lt.s32.totalorder %s16, 1
      %s2264 = scalar_select %p2263, %s16, 1
      %s2265 = smul.addr %s2264, 3
      %s2266 = smul.addr %s2265, 8
      %s2267 = scalar_lea.vmem %s2, %s2266
      %p2268 = scmp.lt.s32.totalorder %s16, 1
      %s2269 = scalar_select %p2268, %s16, 1
      %s2270 = smul.addr %s2269, 48
      %s2271 = smul.addr %s2270, 8
      %s2272 = scalar_lea.vmem %s3, %s2271
      %p2273 = scmp.lt.s32.totalorder %s16, 1
      %s2274 = scalar_select %p2273, %s16, 1
      %s2275 = smul.addr %s2274, 6
      %s2276 = smul.addr %s2275, 8
      %s2277 = scalar_lea.vmem %s4, %s2276
      // Predicated region
      $region29: #{net_cam_feature_forward.1} parent=27 // pred_check
        %p2278 = pneg %p81
      $region30: #{net_cam_feature_forward.1} parent=27 // pred_check_branch
        %2280 = sbr.rel (%p2278) target = $region32
      $region31: #{net_cam_feature_forward.1} parent=27 // pred_region
        _
      $region32: #{net_cam_feature_forward.1} parent=27 // pred_fallthru
        _
      // Predicated region
      $region33: #{net_cam_feature_forward.1} parent=27 // pred_check
        %p2281 = pneg %p107
      $region34: #{net_cam_feature_forward.1} parent=27 // pred_check_branch
        %2283 = sbr.rel (%p2281) target = $region36
      $region35: #{net_cam_feature_forward.1} parent=27 // pred_region
        _
      $region36: #{net_cam_feature_forward.1} parent=27 // pred_fallthru
        _
      // Predicated region
      $region37: #{net_cam_feature_forward.1} parent=27 // pred_check
        %p2284 = pneg %p133
      $region38: #{net_cam_feature_forward.1} parent=27 // pred_check_branch
        %2286 = sbr.rel (%p2284) target = $region40
      $region39: #{net_cam_feature_forward.1} parent=27 // pred_region
        _
      $region40: #{net_cam_feature_forward.1} parent=27 // pred_fallthru
        _
    $region28: #{net_cam_feature_forward.1} parent=5 // pred_fallthru
      _
    %p2287 = scmp.le.s32.totalorder 2, %s11
    // Predicated region
    $region41: #{net_cam_feature_forward.1} parent=5 // pred_check
      %p2288 = pneg %p2287
    $region42: #{net_cam_feature_forward.1} parent=5 // pred_check_branch
      %2290 = sbr.rel (%p2288) target = $region44
    $region43: #{net_cam_feature_forward.1} parent=5 // pred_region
      %s2291 = ssub.s32 %s11, 2
      // Predicated region
      $region45: #{net_cam_feature_forward.1} parent=43 // pred_check
        %p2292 = pneg %p87
      $region46: #{net_cam_feature_forward.1} parent=43 // pred_check_branch
        %2294 = sbr.rel (%p2292) target = $region48
      $region47: #{net_cam_feature_forward.1} parent=43 // pred_region
        %p2295 = scmp.lt.s32.totalorder %s17, 1
        %s2296 = scalar_select %p2295, %s17, 1
        %s2297 = smul.addr %s2296, 3
        %s2298 = smul.addr %s2297, 8
        %s2299 = scalar_lea.vmem %s2, %s2298
      $region48: #{net_cam_feature_forward.1} parent=43 // pred_fallthru
        _
      // Predicated region
      $region49: #{net_cam_feature_forward.1} parent=43 // pred_check
        %p2300 = pneg %p113
      $region50: #{net_cam_feature_forward.1} parent=43 // pred_check_branch
        %2302 = sbr.rel (%p2300) target = $region52
      $region51: #{net_cam_feature_forward.1} parent=43 // pred_region
        %p2303 = scmp.lt.s32.totalorder %s17, 1
        %s2304 = scalar_select %p2303, %s17, 1
        %s2305 = smul.addr %s2304, 48
        %s2306 = smul.addr %s2305, 8
        %s2307 = scalar_lea.vmem %s3, %s2306
      $region52: #{net_cam_feature_forward.1} parent=43 // pred_fallthru
        _
      // Predicated region
      $region53: #{net_cam_feature_forward.1} parent=43 // pred_check
        %p2308 = pneg %p139
      $region54: #{net_cam_feature_forward.1} parent=43 // pred_check_branch
        %2310 = sbr.rel (%p2308) target = $region56
      $region55: #{net_cam_feature_forward.1} parent=43 // pred_region
        %p2311 = scmp.lt.s32.totalorder %s17, 1
        %s2312 = scalar_select %p2311, %s17, 1
        %s2313 = smul.addr %s2312, 6
        %s2314 = smul.addr %s2313, 8
        %s2315 = scalar_lea.vmem %s4, %s2314
      $region56: #{net_cam_feature_forward.1} parent=43 // pred_fallthru
        _
    $region44: #{net_cam_feature_forward.1} parent=5 // pred_fallthru
      _
  $region6: #{net_cam_feature_forward.1} parent=0 // loop_footer
    %s15 = sadd.s32 1, %s11
  $region7: #{net_cam_feature_forward.1} parent=0 // loop_footer_branch
    %10 = sbr.rel target = $region3
  $region8: #{net_cam_feature_forward.1} parent=0 // loop_exit
    _

</llo_original>
